<compile_context>
chip_gen: v7x
topology: tpu7x:2x2x1
jax: 0.10.0
libtpu: 0.0.40
codegen_flags: <defaults>
</compile_context>

<pallas_src>
import math
import functools

import jax
import jax.numpy as jnp
from jax.experimental import pallas as pl
from jax.experimental.pallas import tpu as pltpu

_MIB = 1024 * 1024


# ---------------------------------------------------------------------------
# Fused whole-encoder kernel: grid = (batch tiles, layers)
# ---------------------------------------------------------------------------
def _encoder_stack_kernel(x_ref, mask_ref,
                          w_qkv_ref, w_out_ref, w_ff1_ref, w_ff2_ref,
                          b_qkv_ref, b_ff1_ref, vecs_ref,
                          o_ref,
                          x_carry, ctx_ref,
                          *, num_heads, eps, final_eps):
    Bt, S, E = x_ref.shape
    hd = E // num_heads
    scale = 1.0 / math.sqrt(hd)
    R = Bt * S

    l = pl.program_id(1)
    n_layers = pl.num_programs(1)

    # First layer of each batch tile: load activation into the VMEM carry.
    @pl.when(l == 0)
    def _():
        x_carry[...] = x_ref[...].reshape(R, E)

    x2d = x_carry[...]                      # (R, E) f32
    mask = mask_ref[...]                    # (Bt, 1, S) additive f32 bias

    vecs = vecs_ref[...]                    # (8, E) packed small per-layer params
    ln1_w, ln1_b = vecs[0], vecs[1]
    ln2_w, ln2_b = vecs[2], vecs[3]
    out_b, ff2_b = vecs[4], vecs[5]
    fin_w, fin_b = vecs[6], vecs[7]

    # ---- QKV projection: one bf16 matmul, f32 accumulation ----
    qkv = jnp.dot(x2d.astype(jnp.bfloat16), w_qkv_ref[...],
                  preferred_element_type=jnp.float32) + b_qkv_ref[0]
    # Fold the 1/sqrt(hd) scale into q once (hoisted out of the head loop).
    qb = (qkv[:, 0 * E:1 * E] * scale).reshape(Bt, S, E).astype(jnp.bfloat16)
    kb = qkv[:, 1 * E:2 * E].reshape(Bt, S, E).astype(jnp.bfloat16)
    vb = qkv[:, 2 * E:3 * E].reshape(Bt, S, E).astype(jnp.bfloat16)

    # Hoisted mask broadcast (JAX does not CSE broadcast_in_dim).
    mask_b = jnp.broadcast_to(mask, (Bt, S, S))

    # ---- multi-head attention: head outputs land in a VMEM scratch so the
    #      output projection runs once with full K=E contraction depth ----
    for h in range(num_heads):              # static loop, small num_heads
        sl = slice(h * hd, (h + 1) * hd)
        s = jnp.einsum('bqd,bkd->bqk', qb[:, :, sl], kb[:, :, sl],
                       preferred_element_type=jnp.float32)
        s = s + mask_b
        s = s - jnp.max(s, axis=-1, keepdims=True)
        p = jnp.exp(s)
        p = p * pl.reciprocal(jnp.sum(p, axis=-1, keepdims=True), approx=True)
        hout = jnp.einsum('bqk,bkd->bqd', p.astype(jnp.bfloat16), vb[:, :, sl],
                          preferred_element_type=jnp.float32)   # (Bt, S, hd)
        ctx_ref[:, sl] = hout.reshape(R, hd)

    attn = jnp.dot(ctx_ref[...].astype(jnp.bfloat16), w_out_ref[...],
                   preferred_element_type=jnp.float32) + out_b

    # ---- residual + LayerNorm1 (post-norm, eps=1e-5) ----
    y = x2d + attn
    mu = jnp.mean(y, axis=-1, keepdims=True)
    var = jnp.mean((y - mu) ** 2, axis=-1, keepdims=True)
    y = (y - mu) * jax.lax.rsqrt(var + eps) * ln1_w + ln1_b

    # ---- feed-forward: linear -> relu -> linear (bf16 matmuls) ----
    h1 = jnp.dot(y.astype(jnp.bfloat16), w_ff1_ref[...],
                 preferred_element_type=jnp.float32) + b_ff1_ref[0]
    h1 = jnp.maximum(h1, 0.0)
    f = jnp.dot(h1.astype(jnp.bfloat16), w_ff2_ref[...],
                preferred_element_type=jnp.float32) + ff2_b

    # ---- residual + LayerNorm2 (post-norm, eps=1e-5) ----
    z = y + f
    mu2 = jnp.mean(z, axis=-1, keepdims=True)
    var2 = jnp.mean((z - mu2) ** 2, axis=-1, keepdims=True)
    z = (z - mu2) * jax.lax.rsqrt(var2 + eps) * ln2_w + ln2_b

    # Carry to the next layer (stays in VMEM; no HBM round-trip between layers).
    x_carry[...] = z

    # ---- final encoder LayerNorm (eps=1e-6) + single HBM store (last layer) ----
    @pl.when(l == n_layers - 1)
    def _():
        mu3 = jnp.mean(z, axis=-1, keepdims=True)
        var3 = jnp.mean((z - mu3) ** 2, axis=-1, keepdims=True)
        zf = (z - mu3) * jax.lax.rsqrt(var3 + final_eps) * fin_w + fin_b
        o_ref[...] = zf.reshape(Bt, S, E)


# ---------------------------------------------------------------------------
# Generation-aware tiling / VMEM planning
# ---------------------------------------------------------------------------
def _vmem_capacity_bytes():
    try:
        info = pltpu.get_tpu_info()
        cap = getattr(info, "vmem_capacity_bytes", None)
        if cap:
            return int(cap)
    except Exception:
        pass
    return 64 * _MIB          # conservative fallback (v7x per-TC VMEM)


def _plan_tiling(B, S, E, H):
    cap = _vmem_capacity_bytes()
    budget = int(min(cap * 3 // 4, 100 * _MIB))       # leave compiler headroom
    # Per-layer weight footprint: bf16 matrices + f32 small tensors.
    w_bytes = 2 * (E * 3 * E + E * E + 2 * E * H) + 4 * (3 * E + H + 8 * E)
    if 2 * w_bytes <= budget // 2:
        weight_mode = None                 # default double buffer: prefetch next
        w_resident = 2 * w_bytes           # layer's weights under current compute
    else:
        weight_mode = pl.Buffered(1)       # single-buffer big weights (v7x 64 MiB)
        w_resident = w_bytes
    act_budget = max(budget - w_resident, 4 * _MIB)
    # Rough f32 working set per activation row (carry + ctx + qkv + ffn hidden
    # + LN temps + score row), with ~2x slack for pipeline buffers / copies.
    per_row = 8 * (9 * E + H + S)
    max_rows = max(act_budget // per_row, S)
    bt = max(1, min(B, int(max_rows // max(S, 1))))
    if B >= 2:
        bt = min(bt, B // 2)               # >=2 batch tiles -> feed both v7x TCs
    while B % bt != 0:
        bt -= 1
    return bt, weight_mode, budget


# ---------------------------------------------------------------------------
# Host-side parameter prep (done ONCE, not per forward pass)
# ---------------------------------------------------------------------------
def prepare_encoder_params(params):
    """Pre-transpose, cast to bf16, stack per-layer weights on a leading axis."""
    def stack(fn):
        return jnp.stack([fn(p) for p in params["layers"]], axis=0)

    def vec_rows(p):
        return jnp.stack([p["ln1_w"], p["ln1_b"], p["ln2_w"], p["ln2_b"],
                          p["out_b"], p["lin2_b"],
                          params["final_ln_w"], params["final_ln_b"]],
                         axis=0).astype(jnp.float32)

    return dict(
        num_heads=int(params["num_heads"]),
        w_qkv=stack(lambda p: p["in_w"].T.astype(jnp.bfloat16)),      # (L, E, 3E)
        w_out=stack(lambda p: p["out_w"].T.astype(jnp.bfloat16)),     # (L, E, E)
        w_ff1=stack(lambda p: p["lin1_w"].T.astype(jnp.bfloat16)),    # (L, E, H)
        w_ff2=stack(lambda p: p["lin2_w"].T.astype(jnp.bfloat16)),    # (L, H, E)
        b_qkv=stack(lambda p: p["in_b"].reshape(1, -1).astype(jnp.float32)),
        b_ff1=stack(lambda p: p["lin1_b"].reshape(1, -1).astype(jnp.float32)),
        vecs=stack(vec_rows),                                         # (L, 8, E)
    )


# ---------------------------------------------------------------------------
# Forward pass (one pallas_call for the whole encoder stack)
# ---------------------------------------------------------------------------
def transformer_encoder(student_embed, src_key_padding_mask, prepped,
                        *, eps=1e-5, final_eps=1e-6):
    """student_embed: (B, S, E) f32; src_key_padding_mask: (B, S) bool (True=pad)."""
    x = student_embed.astype(jnp.float32)
    B, S, E = x.shape
    L, _, H = prepped["w_ff1"].shape
    num_heads = int(prepped["num_heads"])
    assert E % num_heads == 0

    mask_bias = jnp.where(src_key_padding_mask, -1e9, 0.0).astype(
        jnp.float32)[:, None, :]                                     # (B, 1, S)

    Bt, weight_mode, vmem_budget = _plan_tiling(B, S, E, H)
    grid = (B // Bt, L)

    def batch_spec(shape):
        return pl.BlockSpec(shape, lambda b, l: (b, 0, 0))

    def layer_spec(shape2d, mode=None):
        bs = (None,) + tuple(shape2d)              # leading layer dim squeezed
        if mode is None:
            return pl.BlockSpec(bs, lambda b, l: (l, 0, 0))
        return pl.BlockSpec(bs, lambda b, l: (l, 0, 0), pipeline_mode=mode)

    kernel = functools.partial(_encoder_stack_kernel, num_heads=num_heads,
                               eps=eps, final_eps=final_eps)

    grid_spec = pltpu.PrefetchScalarGridSpec(
        num_scalar_prefetch=0,
        grid=grid,
        in_specs=[
            batch_spec((Bt, S, E)),                      # x
            batch_spec((Bt, 1, S)),                      # key-padding mask bias
            layer_spec((E, 3 * E), weight_mode),         # W_qkv^T   (bf16)
            layer_spec((E, E), weight_mode),             # W_out^T   (bf16)
            layer_spec((E, H), weight_mode),             # W_ff1^T   (bf16)
            layer_spec((H, E), weight_mode),             # W_ff2^T   (bf16)
            layer_spec((1, 3 * E)),                      # b_qkv
            layer_spec((1, H)),                          # b_ff1
            layer_spec((8, E)),                          # packed small vectors
        ],
        out_specs=batch_spec((Bt, S, E)),
        scratch_shapes=[
            pltpu.VMEM((Bt * S, E), jnp.float32),        # activation carry
            pltpu.VMEM((Bt * S, E), jnp.float32),        # attention context
        ],
    )

    return pl.pallas_call(
        kernel,
        out_shape=jax.ShapeDtypeStruct((B, S, E), jnp.float32),
        grid_spec=grid_spec,
        compiler_params=pltpu.CompilerParams(
            dimension_semantics=("parallel", "arbitrary"),
            vmem_limit_bytes=vmem_budget),
    )(x, mask_bias,
      prepped["w_qkv"], prepped["w_out"], prepped["w_ff1"], prepped["w_ff2"],
      prepped["b_qkv"], prepped["b_ff1"], prepped["vecs"])


# ---------------------------------------------------------------------------
# Deterministic parameter construction (PyTorch layout)
# ---------------------------------------------------------------------------
def make_params(key, embed_size, hidden_size, num_layers, num_heads):
    layers = []
    for l in range(num_layers):
        keys = jax.random.split(jax.random.fold_in(key, l), 4)
        layers.append(dict(
            in_w=0.02 * jax.random.normal(keys[0], (3 * embed_size, embed_size),
                                          jnp.float32),
            in_b=jnp.zeros((3 * embed_size,), jnp.float32),
            out_w=0.02 * jax.random.normal(keys[1], (embed_size, embed_size),
                                           jnp.float32),
            out_b=jnp.zeros((embed_size,), jnp.float32),
            ln1_w=jnp.ones((embed_size,), jnp.float32),
            ln1_b=jnp.zeros((embed_size,), jnp.float32),
            ln2_w=jnp.ones((embed_size,), jnp.float32),
            ln2_b=jnp.zeros((embed_size,), jnp.float32),
            lin1_w=0.02 * jax.random.normal(keys[2], (hidden_size, embed_size),
                                            jnp.float32),
            lin1_b=jnp.zeros((hidden_size,), jnp.float32),
            lin2_w=0.02 * jax.random.normal(keys[3], (embed_size, hidden_size),
                                            jnp.float32),
            lin2_b=jnp.zeros((embed_size,), jnp.float32),
        ))
    return dict(
        layers=layers,
        num_heads=num_heads,
        final_ln_w=jnp.ones((embed_size,), jnp.float32),
        final_ln_b=jnp.zeros((embed_size,), jnp.float32),
    )


# ---------------------------------------------------------------------------
if __name__ == "__main__":
    B, S = 2, 8
    embed_size, hidden_size = 32, 64
    num_layers, num_heads = 2, 4
    p_dropout = 0.1   # unused (inference semantics)

    root = jax.random.PRNGKey(0)
    k_x, k_m, k_p = jax.random.split(root, 3)

    student_embed = jax.random.normal(k_x, (B, S, embed_size), jnp.float32)
    # True = padded key; guarantee at least one valid key per sequence.
    src_key_padding_mask = jax.random.uniform(k_m, (B, S)) > 0.7
    src_key_padding_mask = src_key_padding_mask.at[:, 0].set(False)

    params = make_params(k_p, embed_size, hidden_size, num_layers, num_heads)
    prepped = prepare_encoder_params(params)   # hoisted out of the forward pass

    out = transformer_encoder(student_embed, src_key_padding_mask, prepped)
    jax.block_until_ready(out)
    assert out.shape == (B, S, embed_size)
    assert jnp.all(jnp.isfinite(out))
    print("KERNEL_OK")
</pallas_src>

<mosaic_0001>
module attributes {stable_mosaic.version = 11 : i64} {
  func.func @_encoder_stack_kernel(%arg0: i32, %arg1: i32, %arg2: memref<1x8x32xf32, #tpu.memory_space<vmem>>, %arg3: memref<1x1x8xf32, #tpu.memory_space<vmem>>, %arg4: memref<1x32x96xbf16, #tpu.memory_space<vmem>>, %arg5: memref<1x32x32xbf16, #tpu.memory_space<vmem>>, %arg6: memref<1x32x64xbf16, #tpu.memory_space<vmem>>, %arg7: memref<1x64x32xbf16, #tpu.memory_space<vmem>>, %arg8: memref<1x1x96xf32, #tpu.memory_space<vmem>>, %arg9: memref<1x1x64xf32, #tpu.memory_space<vmem>>, %arg10: memref<1x8x32xf32, #tpu.memory_space<vmem>>, %arg11: memref<1x8x32xf32, #tpu.memory_space<vmem>>, %arg12: memref<8x32xf32, #tpu.memory_space<vmem>>, %arg13: memref<8x32xf32, #tpu.memory_space<vmem>>) attributes {dimension_semantics = [#tpu.dimension_semantics<parallel>, #tpu.dimension_semantics<arbitrary>], iteration_bounds = array<i64: 2, 2>, scalar_prefetch = 0 : i64, scratch_operands = 2 : i64, tpu.core_type = #tpu.core_type<tc>, window_params = [{transform_indices = @transform_0, window_bounds = array<i64: 1, 8, 32>}, {transform_indices = @transform_1, window_bounds = array<i64: 1, 1, 8>}, {transform_indices = @transform_2, window_bounds = array<i64: 1, 32, 96>}, {transform_indices = @transform_3, window_bounds = array<i64: 1, 32, 32>}, {transform_indices = @transform_4, window_bounds = array<i64: 1, 32, 64>}, {transform_indices = @transform_5, window_bounds = array<i64: 1, 64, 32>}, {transform_indices = @transform_6, window_bounds = array<i64: 1, 1, 96>}, {transform_indices = @transform_7, window_bounds = array<i64: 1, 1, 64>}, {transform_indices = @transform_8, window_bounds = array<i64: 1, 8, 32>}, {transform_indices = @transform_9, window_bounds = array<i64: 1, 8, 32>}]} {
    %c0_i32 = arith.constant 0 : i32
    %0 = arith.cmpi eq, %arg1, %c0_i32 : i32
    %1 = arith.extui %0 : i1 to i32
    %c0_i32_0 = arith.constant 0 : i32
    %2 = arith.cmpi ne, %1, %c0_i32_0 : i32
    scf.if %2 {
      %c0_67 = arith.constant 0 : index
      %c0_68 = arith.constant 0 : index
      %c0_69 = arith.constant 0 : index
      %201 = vector.load %arg2[%c0_67, %c0_68, %c0_69] : memref<1x8x32xf32, #tpu.memory_space<vmem>>, vector<1x8x32xf32>
      %202 = vector.shape_cast %201 : vector<1x8x32xf32> to vector<8x32xf32>
      %c0_70 = arith.constant 0 : index
      %c0_71 = arith.constant 0 : index
      %203 = vector.load %arg12[%c0_70, %c0_71] : memref<8x32xf32, #tpu.memory_space<vmem>>, vector<8x32xf32>
      tpu.vector_store %arg12[%c0_70, %c0_71], %202 {strides = array<i32>} : memref<8x32xf32, #tpu.memory_space<vmem>>, vector<8x32xf32>,
    } else {
    }
    %c0 = arith.constant 0 : index
    %c0_1 = arith.constant 0 : index
    %3 = vector.load %arg12[%c0, %c0_1] : memref<8x32xf32, #tpu.memory_space<vmem>>, vector<8x32xf32>
    %c0_2 = arith.constant 0 : index
    %c0_3 = arith.constant 0 : index
    %c0_4 = arith.constant 0 : index
    %4 = vector.load %arg3[%c0_2, %c0_3, %c0_4] : memref<1x1x8xf32, #tpu.memory_space<vmem>>, vector<1x1x8xf32>
    %c0_5 = arith.constant 0 : index
    %c0_6 = arith.constant 0 : index
    %c0_7 = arith.constant 0 : index
    %5 = vector.load %arg10[%c0_5, %c0_6, %c0_7] : memref<1x8x32xf32, #tpu.memory_space<vmem>>, vector<1x8x32xf32>
    %6 = vector.shape_cast %5 : vector<1x8x32xf32> to vector<8x32xf32>
    %7 = vector.extract_strided_slice %6 {offsets = [0, 0], sizes = [1, 32], strides = [1, 1]} : vector<8x32xf32> to vector<1x32xf32>
    %8 = vector.shape_cast %7 : vector<1x32xf32> to vector<32xf32>
    %9 = vector.extract_strided_slice %6 {offsets = [1, 0], sizes = [1, 32], strides = [1, 1]} : vector<8x32xf32> to vector<1x32xf32>
    %10 = vector.shape_cast %9 : vector<1x32xf32> to vector<32xf32>
    %11 = vector.extract_strided_slice %6 {offsets = [2, 0], sizes = [1, 32], strides = [1, 1]} : vector<8x32xf32> to vector<1x32xf32>
    %12 = vector.shape_cast %11 : vector<1x32xf32> to vector<32xf32>
    %13 = vector.extract_strided_slice %6 {offsets = [3, 0], sizes = [1, 32], strides = [1, 1]} : vector<8x32xf32> to vector<1x32xf32>
    %14 = vector.shape_cast %13 : vector<1x32xf32> to vector<32xf32>
    %15 = vector.extract_strided_slice %6 {offsets = [4, 0], sizes = [1, 32], strides = [1, 1]} : vector<8x32xf32> to vector<1x32xf32>
    %16 = vector.shape_cast %15 : vector<1x32xf32> to vector<32xf32>
    %17 = vector.extract_strided_slice %6 {offsets = [5, 0], sizes = [1, 32], strides = [1, 1]} : vector<8x32xf32> to vector<1x32xf32>
    %18 = vector.shape_cast %17 : vector<1x32xf32> to vector<32xf32>
    %19 = vector.extract_strided_slice %6 {offsets = [6, 0], sizes = [1, 32], strides = [1, 1]} : vector<8x32xf32> to vector<1x32xf32>
    %20 = vector.shape_cast %19 : vector<1x32xf32> to vector<32xf32>
    %21 = vector.extract_strided_slice %6 {offsets = [7, 0], sizes = [1, 32], strides = [1, 1]} : vector<8x32xf32> to vector<1x32xf32>
    %22 = vector.shape_cast %21 : vector<1x32xf32> to vector<32xf32>
    %23 = arith.truncf %3 : vector<8x32xf32> to vector<8x32xbf16>
    %c0_8 = arith.constant 0 : index
    %c0_9 = arith.constant 0 : index
    %c0_10 = arith.constant 0 : index
    %24 = vector.load %arg4[%c0_8, %c0_9, %c0_10] : memref<1x32x96xbf16, #tpu.memory_space<vmem>>, vector<1x32x96xbf16>
    %25 = vector.shape_cast %24 : vector<1x32x96xbf16> to vector<32x96xbf16>
    %cst = arith.constant dense<0.000000e+00> : vector<8x96xf32>
    %26 = tpu.matmul %23, %25, %cst {dimension_numbers = #tpu.dot_dimension_numbers<[1], [0], [0], [1], [0, 0, 1, 1], [], []>} : vector<8x32xbf16>, vector<32x96xbf16>, vector<8x96xf32> -> vector<8x96xf32>
    %c0_11 = arith.constant 0 : index
    %c0_12 = arith.constant 0 : index
    %c0_13 = arith.constant 0 : index
    %27 = vector.load %arg8[%c0_11, %c0_12, %c0_13] : memref<1x1x96xf32, #tpu.memory_space<vmem>>, vector<1x1x96xf32>
    %28 = vector.shape_cast %27 : vector<1x1x96xf32> to vector<96xf32>
    %29 = vector.shape_cast %28 : vector<96xf32> to vector<1x96xf32>
    %30 = vector.broadcast %29 : vector<1x96xf32> to vector<8x96xf32>
    %31 = arith.addf %26, %30 : vector<8x96xf32>
    %32 = vector.extract_strided_slice %31 {offsets = [0, 0], sizes = [8, 32], strides = [1, 1]} : vector<8x96xf32> to vector<8x32xf32>
    %cst_14 = arith.constant 0.353553385 : f32
    %33 = vector.broadcast %cst_14 : f32 to vector<8x32xf32>
    %34 = arith.mulf %32, %33 : vector<8x32xf32>
    %35 = vector.shape_cast %34 : vector<8x32xf32> to vector<1x8x32xf32>
    %36 = arith.truncf %35 : vector<1x8x32xf32> to vector<1x8x32xbf16>
    %37 = vector.extract_strided_slice %31 {offsets = [0, 32], sizes = [8, 32], strides = [1, 1]} : vector<8x96xf32> to vector<8x32xf32>
    %38 = vector.shape_cast %37 : vector<8x32xf32> to vector<1x8x32xf32>
    %39 = arith.truncf %38 : vector<1x8x32xf32> to vector<1x8x32xbf16>
    %40 = vector.extract_strided_slice %31 {offsets = [0, 64], sizes = [8, 32], strides = [1, 1]} : vector<8x96xf32> to vector<8x32xf32>
    %41 = vector.shape_cast %40 : vector<8x32xf32> to vector<1x8x32xf32>
    %42 = arith.truncf %41 : vector<1x8x32xf32> to vector<1x8x32xbf16>
    %43 = vector.shape_cast %4 : vector<1x1x8xf32> to vector<1x1x8xf32>
    %44 = vector.broadcast %43 : vector<1x1x8xf32> to vector<1x8x8xf32>
    %45 = vector.extract_strided_slice %36 {offsets = [0, 0, 0], sizes = [1, 8, 8], strides = [1, 1, 1]} : vector<1x8x32xbf16> to vector<1x8x8xbf16>
    %46 = vector.extract_strided_slice %39 {offsets = [0, 0, 0], sizes = [1, 8, 8], strides = [1, 1, 1]} : vector<1x8x32xbf16> to vector<1x8x8xbf16>
    "tpu.trace_start"() <{level = 10 : i32, message = "bqd,bkd->bqk"}> : () -> ()
    %cst_15 = arith.constant dense<0.000000e+00> : vector<1x8x8xf32>
    %47 = tpu.matmul %45, %46, %cst_15 {dimension_numbers = #tpu.dot_dimension_numbers<[2], [2], [1], [1], [0, 0, 0, 1, 1, 1], [0], [0]>} : vector<1x8x8xbf16>, vector<1x8x8xbf16>, vector<1x8x8xf32> -> vector<1x8x8xf32>
    "tpu.trace_stop"() : () -> ()
    %48 = arith.addf %47, %44 : vector<1x8x8xf32>
    %cst_16 = arith.constant dense<0xFF800000> : vector<1x8xf32>
    %49 = vector.multi_reduction <maximumf>, %48, %cst_16 [2] : vector<1x8x8xf32> to vector<1x8xf32>
    %50 = vector.shape_cast %49 : vector<1x8xf32> to vector<1x8x1xf32>
    %51 = vector.broadcast %50 : vector<1x8x1xf32> to vector<1x8x8xf32>
    %52 = arith.subf %48, %51 : vector<1x8x8xf32>
    %53 = math.exp %52 : vector<1x8x8xf32>
    %cst_17 = arith.constant dense<0.000000e+00> : vector<1x8xf32>
    %54 = vector.multi_reduction <add>, %53, %cst_17 [2] : vector<1x8x8xf32> to vector<1x8xf32>
    %55 = vector.shape_cast %54 : vector<1x8xf32> to vector<1x8x1xf32>
    %56 = tpu.reciprocal %55 {approx = true} : vector<1x8x1xf32> -> vector<1x8x1xf32>
    %57 = vector.broadcast %56 : vector<1x8x1xf32> to vector<1x8x8xf32>
    %58 = arith.mulf %53, %57 : vector<1x8x8xf32>
    %59 = arith.truncf %58 : vector<1x8x8xf32> to vector<1x8x8xbf16>
    %60 = vector.extract_strided_slice %42 {offsets = [0, 0, 0], sizes = [1, 8, 8], strides = [1, 1, 1]} : vector<1x8x32xbf16> to vector<1x8x8xbf16>
    "tpu.trace_start"() <{level = 10 : i32, message = "bqk,bkd->bqd"}> : () -> ()
    %cst_18 = arith.constant dense<0.000000e+00> : vector<1x8x8xf32>
    %61 = tpu.matmul %59, %60, %cst_18 {dimension_numbers = #tpu.dot_dimension_numbers<[2], [1], [1], [2], [0, 0, 0, 1, 1, 2], [0], [0]>} : vector<1x8x8xbf16>, vector<1x8x8xbf16>, vector<1x8x8xf32> -> vector<1x8x8xf32>
    "tpu.trace_stop"() : () -> ()
    %62 = vector.shape_cast %61 : vector<1x8x8xf32> to vector<8x8xf32>
    %c0_19 = arith.constant 0 : index
    %c0_20 = arith.constant 0 : index
    %63 = vector.load %arg13[%c0_19, %c0_20] : memref<8x32xf32, #tpu.memory_space<vmem>>, vector<8x8xf32>
    tpu.vector_store %arg13[%c0_19, %c0_20], %62 {strides = array<i32>} : memref<8x32xf32, #tpu.memory_space<vmem>>, vector<8x8xf32>,
    %64 = vector.extract_strided_slice %36 {offsets = [0, 0, 8], sizes = [1, 8, 8], strides = [1, 1, 1]} : vector<1x8x32xbf16> to vector<1x8x8xbf16>
    %65 = vector.extract_strided_slice %39 {offsets = [0, 0, 8], sizes = [1, 8, 8], strides = [1, 1, 1]} : vector<1x8x32xbf16> to vector<1x8x8xbf16>
    "tpu.trace_start"() <{level = 10 : i32, message = "bqd,bkd->bqk"}> : () -> ()
    %cst_21 = arith.constant dense<0.000000e+00> : vector<1x8x8xf32>
    %66 = tpu.matmul %64, %65, %cst_21 {dimension_numbers = #tpu.dot_dimension_numbers<[2], [2], [1], [1], [0, 0, 0, 1, 1, 1], [0], [0]>} : vector<1x8x8xbf16>, vector<1x8x8xbf16>, vector<1x8x8xf32> -> vector<1x8x8xf32>
    "tpu.trace_stop"() : () -> ()
    %67 = arith.addf %66, %44 : vector<1x8x8xf32>
    %cst_22 = arith.constant dense<0xFF800000> : vector<1x8xf32>
    %68 = vector.multi_reduction <maximumf>, %67, %cst_22 [2] : vector<1x8x8xf32> to vector<1x8xf32>
    %69 = vector.shape_cast %68 : vector<1x8xf32> to vector<1x8x1xf32>
    %70 = vector.broadcast %69 : vector<1x8x1xf32> to vector<1x8x8xf32>
    %71 = arith.subf %67, %70 : vector<1x8x8xf32>
    %72 = math.exp %71 : vector<1x8x8xf32>
    %cst_23 = arith.constant dense<0.000000e+00> : vector<1x8xf32>
    %73 = vector.multi_reduction <add>, %72, %cst_23 [2] : vector<1x8x8xf32> to vector<1x8xf32>
    %74 = vector.shape_cast %73 : vector<1x8xf32> to vector<1x8x1xf32>
    %75 = tpu.reciprocal %74 {approx = true} : vector<1x8x1xf32> -> vector<1x8x1xf32>
    %76 = vector.broadcast %75 : vector<1x8x1xf32> to vector<1x8x8xf32>
    %77 = arith.mulf %72, %76 : vector<1x8x8xf32>
    %78 = arith.truncf %77 : vector<1x8x8xf32> to vector<1x8x8xbf16>
    %79 = vector.extract_strided_slice %42 {offsets = [0, 0, 8], sizes = [1, 8, 8], strides = [1, 1, 1]} : vector<1x8x32xbf16> to vector<1x8x8xbf16>
    "tpu.trace_start"() <{level = 10 : i32, message = "bqk,bkd->bqd"}> : () -> ()
    %cst_24 = arith.constant dense<0.000000e+00> : vector<1x8x8xf32>
    %80 = tpu.matmul %78, %79, %cst_24 {dimension_numbers = #tpu.dot_dimension_numbers<[2], [1], [1], [2], [0, 0, 0, 1, 1, 2], [0], [0]>} : vector<1x8x8xbf16>, vector<1x8x8xbf16>, vector<1x8x8xf32> -> vector<1x8x8xf32>
    "tpu.trace_stop"() : () -> ()
    %81 = vector.shape_cast %80 : vector<1x8x8xf32> to vector<8x8xf32>
    %c0_25 = arith.constant 0 : index
    %c8 = arith.constant 8 : index
    %82 = vector.load %arg13[%c0_25, %c8] : memref<8x32xf32, #tpu.memory_space<vmem>>, vector<8x8xf32>
    tpu.vector_store %arg13[%c0_25, %c8], %81 {strides = array<i32>} : memref<8x32xf32, #tpu.memory_space<vmem>>, vector<8x8xf32>,
    %83 = vector.extract_strided_slice %36 {offsets = [0, 0, 16], sizes = [1, 8, 8], strides = [1, 1, 1]} : vector<1x8x32xbf16> to vector<1x8x8xbf16>
    %84 = vector.extract_strided_slice %39 {offsets = [0, 0, 16], sizes = [1, 8, 8], strides = [1, 1, 1]} : vector<1x8x32xbf16> to vector<1x8x8xbf16>
    "tpu.trace_start"() <{level = 10 : i32, message = "bqd,bkd->bqk"}> : () -> ()
    %cst_26 = arith.constant dense<0.000000e+00> : vector<1x8x8xf32>
    %85 = tpu.matmul %83, %84, %cst_26 {dimension_numbers = #tpu.dot_dimension_numbers<[2], [2], [1], [1], [0, 0, 0, 1, 1, 1], [0], [0]>} : vector<1x8x8xbf16>, vector<1x8x8xbf16>, vector<1x8x8xf32> -> vector<1x8x8xf32>
    "tpu.trace_stop"() : () -> ()
    %86 = arith.addf %85, %44 : vector<1x8x8xf32>
    %cst_27 = arith.constant dense<0xFF800000> : vector<1x8xf32>
    %87 = vector.multi_reduction <maximumf>, %86, %cst_27 [2] : vector<1x8x8xf32> to vector<1x8xf32>
    %88 = vector.shape_cast %87 : vector<1x8xf32> to vector<1x8x1xf32>
    %89 = vector.broadcast %88 : vector<1x8x1xf32> to vector<1x8x8xf32>
    %90 = arith.subf %86, %89 : vector<1x8x8xf32>
    %91 = math.exp %90 : vector<1x8x8xf32>
    %cst_28 = arith.constant dense<0.000000e+00> : vector<1x8xf32>
    %92 = vector.multi_reduction <add>, %91, %cst_28 [2] : vector<1x8x8xf32> to vector<1x8xf32>
    %93 = vector.shape_cast %92 : vector<1x8xf32> to vector<1x8x1xf32>
    %94 = tpu.reciprocal %93 {approx = true} : vector<1x8x1xf32> -> vector<1x8x1xf32>
    %95 = vector.broadcast %94 : vector<1x8x1xf32> to vector<1x8x8xf32>
    %96 = arith.mulf %91, %95 : vector<1x8x8xf32>
    %97 = arith.truncf %96 : vector<1x8x8xf32> to vector<1x8x8xbf16>
    %98 = vector.extract_strided_slice %42 {offsets = [0, 0, 16], sizes = [1, 8, 8], strides = [1, 1, 1]} : vector<1x8x32xbf16> to vector<1x8x8xbf16>
    "tpu.trace_start"() <{level = 10 : i32, message = "bqk,bkd->bqd"}> : () -> ()
    %cst_29 = arith.constant dense<0.000000e+00> : vector<1x8x8xf32>
    %99 = tpu.matmul %97, %98, %cst_29 {dimension_numbers = #tpu.dot_dimension_numbers<[2], [1], [1], [2], [0, 0, 0, 1, 1, 2], [0], [0]>} : vector<1x8x8xbf16>, vector<1x8x8xbf16>, vector<1x8x8xf32> -> vector<1x8x8xf32>
    "tpu.trace_stop"() : () -> ()
    %100 = vector.shape_cast %99 : vector<1x8x8xf32> to vector<8x8xf32>
    %c0_30 = arith.constant 0 : index
    %c16 = arith.constant 16 : index
    %101 = vector.load %arg13[%c0_30, %c16] : memref<8x32xf32, #tpu.memory_space<vmem>>, vector<8x8xf32>
    tpu.vector_store %arg13[%c0_30, %c16], %100 {strides = array<i32>} : memref<8x32xf32, #tpu.memory_space<vmem>>, vector<8x8xf32>,
    %102 = vector.extract_strided_slice %36 {offsets = [0, 0, 24], sizes = [1, 8, 8], strides = [1, 1, 1]} : vector<1x8x32xbf16> to vector<1x8x8xbf16>
    %103 = vector.extract_strided_slice %39 {offsets = [0, 0, 24], sizes = [1, 8, 8], strides = [1, 1, 1]} : vector<1x8x32xbf16> to vector<1x8x8xbf16>
    "tpu.trace_start"() <{level = 10 : i32, message = "bqd,bkd->bqk"}> : () -> ()
    %cst_31 = arith.constant dense<0.000000e+00> : vector<1x8x8xf32>
    %104 = tpu.matmul %102, %103, %cst_31 {dimension_numbers = #tpu.dot_dimension_numbers<[2], [2], [1], [1], [0, 0, 0, 1, 1, 1], [0], [0]>} : vector<1x8x8xbf16>, vector<1x8x8xbf16>, vector<1x8x8xf32> -> vector<1x8x8xf32>
    "tpu.trace_stop"() : () -> ()
    %105 = arith.addf %104, %44 : vector<1x8x8xf32>
    %cst_32 = arith.constant dense<0xFF800000> : vector<1x8xf32>
    %106 = vector.multi_reduction <maximumf>, %105, %cst_32 [2] : vector<1x8x8xf32> to vector<1x8xf32>
    %107 = vector.shape_cast %106 : vector<1x8xf32> to vector<1x8x1xf32>
    %108 = vector.broadcast %107 : vector<1x8x1xf32> to vector<1x8x8xf32>
    %109 = arith.subf %105, %108 : vector<1x8x8xf32>
    %110 = math.exp %109 : vector<1x8x8xf32>
    %cst_33 = arith.constant dense<0.000000e+00> : vector<1x8xf32>
    %111 = vector.multi_reduction <add>, %110, %cst_33 [2] : vector<1x8x8xf32> to vector<1x8xf32>
    %112 = vector.shape_cast %111 : vector<1x8xf32> to vector<1x8x1xf32>
    %113 = tpu.reciprocal %112 {approx = true} : vector<1x8x1xf32> -> vector<1x8x1xf32>
    %114 = vector.broadcast %113 : vector<1x8x1xf32> to vector<1x8x8xf32>
    %115 = arith.mulf %110, %114 : vector<1x8x8xf32>
    %116 = arith.truncf %115 : vector<1x8x8xf32> to vector<1x8x8xbf16>
    %117 = vector.extract_strided_slice %42 {offsets = [0, 0, 24], sizes = [1, 8, 8], strides = [1, 1, 1]} : vector<1x8x32xbf16> to vector<1x8x8xbf16>
    "tpu.trace_start"() <{level = 10 : i32, message = "bqk,bkd->bqd"}> : () -> ()
    %cst_34 = arith.constant dense<0.000000e+00> : vector<1x8x8xf32>
    %118 = tpu.matmul %116, %117, %cst_34 {dimension_numbers = #tpu.dot_dimension_numbers<[2], [1], [1], [2], [0, 0, 0, 1, 1, 2], [0], [0]>} : vector<1x8x8xbf16>, vector<1x8x8xbf16>, vector<1x8x8xf32> -> vector<1x8x8xf32>
    "tpu.trace_stop"() : () -> ()
    %119 = vector.shape_cast %118 : vector<1x8x8xf32> to vector<8x8xf32>
    %c0_35 = arith.constant 0 : index
    %c24 = arith.constant 24 : index
    %120 = vector.load %arg13[%c0_35, %c24] : memref<8x32xf32, #tpu.memory_space<vmem>>, vector<8x8xf32>
    tpu.vector_store %arg13[%c0_35, %c24], %119 {strides = array<i32>} : memref<8x32xf32, #tpu.memory_space<vmem>>, vector<8x8xf32>,
    %c0_36 = arith.constant 0 : index
    %c0_37 = arith.constant 0 : index
    %121 = vector.load %arg13[%c0_36, %c0_37] : memref<8x32xf32, #tpu.memory_space<vmem>>, vector<8x32xf32>
    %122 = arith.truncf %121 : vector<8x32xf32> to vector<8x32xbf16>
    %c0_38 = arith.constant 0 : index
    %c0_39 = arith.constant 0 : index
    %c0_40 = arith.constant 0 : index
    %123 = vector.load %arg5[%c0_38, %c0_39, %c0_40] : memref<1x32x32xbf16, #tpu.memory_space<vmem>>, vector<1x32x32xbf16>
    %124 = vector.shape_cast %123 : vector<1x32x32xbf16> to vector<32x32xbf16>
    %cst_41 = arith.constant dense<0.000000e+00> : vector<8x32xf32>
    %125 = tpu.matmul %122, %124, %cst_41 {dimension_numbers = #tpu.dot_dimension_numbers<[1], [0], [0], [1], [0, 0, 1, 1], [], []>} : vector<8x32xbf16>, vector<32x32xbf16>, vector<8x32xf32> -> vector<8x32xf32>
    %126 = vector.shape_cast %16 : vector<32xf32> to vector<1x32xf32>
    %127 = vector.broadcast %126 : vector<1x32xf32> to vector<8x32xf32>
    %128 = arith.addf %125, %127 : vector<8x32xf32>
    %129 = arith.addf %3, %128 : vector<8x32xf32>
    %cst_42 = arith.constant dense<0.000000e+00> : vector<8xf32>
    %130 = vector.multi_reduction <add>, %129, %cst_42 [1] : vector<8x32xf32> to vector<8xf32>
    %131 = vector.shape_cast %130 : vector<8xf32> to vector<8x1xf32>
    %cst_43 = arith.constant 3.200000e+01 : f32
    %132 = vector.broadcast %cst_43 : f32 to vector<8x1xf32>
    %133 = arith.divf %131, %132 : vector<8x1xf32>
    %134 = vector.broadcast %133 : vector<8x1xf32> to vector<8x32xf32>
    %135 = arith.subf %129, %134 : vector<8x32xf32>
    %136 = arith.mulf %135, %135 : vector<8x32xf32>
    %cst_44 = arith.constant dense<0.000000e+00> : vector<8xf32>
    %137 = vector.multi_reduction <add>, %136, %cst_44 [1] : vector<8x32xf32> to vector<8xf32>
    %138 = vector.shape_cast %137 : vector<8xf32> to vector<8x1xf32>
    %cst_45 = arith.constant 3.200000e+01 : f32
    %139 = vector.broadcast %cst_45 : f32 to vector<8x1xf32>
    %140 = arith.divf %138, %139 : vector<8x1xf32>
    %141 = vector.broadcast %133 : vector<8x1xf32> to vector<8x32xf32>
    %142 = arith.subf %129, %141 : vector<8x32xf32>
    %cst_46 = arith.constant 9.99999974E-6 : f32
    %143 = vector.broadcast %cst_46 : f32 to vector<8x1xf32>
    %144 = arith.addf %140, %143 : vector<8x1xf32>
    %145 = math.rsqrt %144 : vector<8x1xf32>
    %146 = vector.broadcast %145 : vector<8x1xf32> to vector<8x32xf32>
    %147 = arith.mulf %142, %146 : vector<8x32xf32>
    %148 = vector.shape_cast %8 : vector<32xf32> to vector<1x32xf32>
    %149 = vector.broadcast %148 : vector<1x32xf32> to vector<8x32xf32>
    %150 = arith.mulf %147, %149 : vector<8x32xf32>
    %151 = vector.shape_cast %10 : vector<32xf32> to vector<1x32xf32>
    %152 = vector.broadcast %151 : vector<1x32xf32> to vector<8x32xf32>
    %153 = arith.addf %150, %152 : vector<8x32xf32>
    %154 = arith.truncf %153 : vector<8x32xf32> to vector<8x32xbf16>
    %c0_47 = arith.constant 0 : index
    %c0_48 = arith.constant 0 : index
    %c0_49 = arith.constant 0 : index
    %155 = vector.load %arg6[%c0_47, %c0_48, %c0_49] : memref<1x32x64xbf16, #tpu.memory_space<vmem>>, vector<1x32x64xbf16>
    %156 = vector.shape_cast %155 : vector<1x32x64xbf16> to vector<32x64xbf16>
    %cst_50 = arith.constant dense<0.000000e+00> : vector<8x64xf32>
    %157 = tpu.matmul %154, %156, %cst_50 {dimension_numbers = #tpu.dot_dimension_numbers<[1], [0], [0], [1], [0, 0, 1, 1], [], []>} : vector<8x32xbf16>, vector<32x64xbf16>, vector<8x64xf32> -> vector<8x64xf32>
    %c0_51 = arith.constant 0 : index
    %c0_52 = arith.constant 0 : index
    %c0_53 = arith.constant 0 : index
    %158 = vector.load %arg9[%c0_51, %c0_52, %c0_53] : memref<1x1x64xf32, #tpu.memory_space<vmem>>, vector<1x1x64xf32>
    %159 = vector.shape_cast %158 : vector<1x1x64xf32> to vector<64xf32>
    %160 = vector.shape_cast %159 : vector<64xf32> to vector<1x64xf32>
    %161 = vector.broadcast %160 : vector<1x64xf32> to vector<8x64xf32>
    %162 = arith.addf %157, %161 : vector<8x64xf32>
    %cst_54 = arith.constant 0.000000e+00 : f32
    %163 = vector.broadcast %cst_54 : f32 to vector<8x64xf32>
    %164 = arith.maximumf %162, %163 : vector<8x64xf32>
    %165 = arith.truncf %164 : vector<8x64xf32> to vector<8x64xbf16>
    %c0_55 = arith.constant 0 : index
    %c0_56 = arith.constant 0 : index
    %c0_57 = arith.constant 0 : index
    %166 = vector.load %arg7[%c0_55, %c0_56, %c0_57] : memref<1x64x32xbf16, #tpu.memory_space<vmem>>, vector<1x64x32xbf16>
    %167 = vector.shape_cast %166 : vector<1x64x32xbf16> to vector<64x32xbf16>
    %cst_58 = arith.constant dense<0.000000e+00> : vector<8x32xf32>
    %168 = tpu.matmul %165, %167, %cst_58 {dimension_numbers = #tpu.dot_dimension_numbers<[1], [0], [0], [1], [0, 0, 1, 1], [], []>} : vector<8x64xbf16>, vector<64x32xbf16>, vector<8x32xf32> -> vector<8x32xf32>
    %169 = vector.shape_cast %18 : vector<32xf32> to vector<1x32xf32>
    %170 = vector.broadcast %169 : vector<1x32xf32> to vector<8x32xf32>
    %171 = arith.addf %168, %170 : vector<8x32xf32>
    %172 = arith.addf %153, %171 : vector<8x32xf32>
    %cst_59 = arith.constant dense<0.000000e+00> : vector<8xf32>
    %173 = vector.multi_reduction <add>, %172, %cst_59 [1] : vector<8x32xf32> to vector<8xf32>
    %174 = vector.shape_cast %173 : vector<8xf32> to vector<8x1xf32>
    %cst_60 = arith.constant 3.200000e+01 : f32
    %175 = vector.broadcast %cst_60 : f32 to vector<8x1xf32>
    %176 = arith.divf %174, %175 : vector<8x1xf32>
    %177 = vector.broadcast %176 : vector<8x1xf32> to vector<8x32xf32>
    %178 = arith.subf %172, %177 : vector<8x32xf32>
    %179 = arith.mulf %178, %178 : vector<8x32xf32>
    %cst_61 = arith.constant dense<0.000000e+00> : vector<8xf32>
    %180 = vector.multi_reduction <add>, %179, %cst_61 [1] : vector<8x32xf32> to vector<8xf32>
    %181 = vector.shape_cast %180 : vector<8xf32> to vector<8x1xf32>
    %cst_62 = arith.constant 3.200000e+01 : f32
    %182 = vector.broadcast %cst_62 : f32 to vector<8x1xf32>
    %183 = arith.divf %181, %182 : vector<8x1xf32>
    %184 = vector.broadcast %176 : vector<8x1xf32> to vector<8x32xf32>
    %185 = arith.subf %172, %184 : vector<8x32xf32>
    %cst_63 = arith.constant 9.99999974E-6 : f32
    %186 = vector.broadcast %cst_63 : f32 to vector<8x1xf32>
    %187 = arith.addf %183, %186 : vector<8x1xf32>
    %188 = math.rsqrt %187 : vector<8x1xf32>
    %189 = vector.broadcast %188 : vector<8x1xf32> to vector<8x32xf32>
    %190 = arith.mulf %185, %189 : vector<8x32xf32>
    %191 = vector.shape_cast %12 : vector<32xf32> to vector<1x32xf32>
    %192 = vector.broadcast %191 : vector<1x32xf32> to vector<8x32xf32>
    %193 = arith.mulf %190, %192 : vector<8x32xf32>
    %194 = vector.shape_cast %14 : vector<32xf32> to vector<1x32xf32>
    %195 = vector.broadcast %194 : vector<1x32xf32> to vector<8x32xf32>
    %196 = arith.addf %193, %195 : vector<8x32xf32>
    %c0_64 = arith.constant 0 : index
    %c0_65 = arith.constant 0 : index
    %197 = vector.load %arg12[%c0_64, %c0_65] : memref<8x32xf32, #tpu.memory_space<vmem>>, vector<8x32xf32>
    tpu.vector_store %arg12[%c0_64, %c0_65], %196 {strides = array<i32>} : memref<8x32xf32, #tpu.memory_space<vmem>>, vector<8x32xf32>,
    %c1_i32 = arith.constant 1 : i32
    %198 = arith.cmpi eq, %arg1, %c1_i32 : i32
    %199 = arith.extui %198 : i1 to i32
    %c0_i32_66 = arith.constant 0 : i32
    %200 = arith.cmpi ne, %199, %c0_i32_66 : i32
    scf.if %200 {
      %cst_67 = arith.constant dense<0.000000e+00> : vector<8xf32>
      %201 = vector.multi_reduction <add>, %196, %cst_67 [1] : vector<8x32xf32> to vector<8xf32>
      %202 = vector.shape_cast %201 : vector<8xf32> to vector<8x1xf32>
      %cst_68 = arith.constant 3.200000e+01 : f32
      %203 = vector.broadcast %cst_68 : f32 to vector<8x1xf32>
      %204 = arith.divf %202, %203 : vector<8x1xf32>
      %205 = vector.broadcast %204 : vector<8x1xf32> to vector<8x32xf32>
      %206 = arith.subf %196, %205 : vector<8x32xf32>
      %207 = arith.mulf %206, %206 : vector<8x32xf32>
      %cst_69 = arith.constant dense<0.000000e+00> : vector<8xf32>
      %208 = vector.multi_reduction <add>, %207, %cst_69 [1] : vector<8x32xf32> to vector<8xf32>
      %209 = vector.shape_cast %208 : vector<8xf32> to vector<8x1xf32>
      %cst_70 = arith.constant 3.200000e+01 : f32
      %210 = vector.broadcast %cst_70 : f32 to vector<8x1xf32>
      %211 = arith.divf %209, %210 : vector<8x1xf32>
      %212 = vector.broadcast %204 : vector<8x1xf32> to vector<8x32xf32>
      %213 = arith.subf %196, %212 : vector<8x32xf32>
      %cst_71 = arith.constant 9.99999997E-7 : f32
      %214 = vector.broadcast %cst_71 : f32 to vector<8x1xf32>
      %215 = arith.addf %211, %214 : vector<8x1xf32>
      %216 = math.rsqrt %215 : vector<8x1xf32>
      %217 = vector.broadcast %216 : vector<8x1xf32> to vector<8x32xf32>
      %218 = arith.mulf %213, %217 : vector<8x32xf32>
      %219 = vector.shape_cast %20 : vector<32xf32> to vector<1x32xf32>
      %220 = vector.broadcast %219 : vector<1x32xf32> to vector<8x32xf32>
      %221 = arith.mulf %218, %220 : vector<8x32xf32>
      %222 = vector.shape_cast %22 : vector<32xf32> to vector<1x32xf32>
      %223 = vector.broadcast %222 : vector<1x32xf32> to vector<8x32xf32>
      %224 = arith.addf %221, %223 : vector<8x32xf32>
      %225 = vector.shape_cast %224 : vector<8x32xf32> to vector<1x8x32xf32>
      %c0_72 = arith.constant 0 : index
      %c0_73 = arith.constant 0 : index
      %c0_74 = arith.constant 0 : index
      %226 = vector.load %arg11[%c0_72, %c0_73, %c0_74] : memref<1x8x32xf32, #tpu.memory_space<vmem>>, vector<1x8x32xf32>
      tpu.vector_store %arg11[%c0_72, %c0_73, %c0_74], %225 {strides = array<i32>} : memref<1x8x32xf32, #tpu.memory_space<vmem>>, vector<1x8x32xf32>,
    } else {
    }
    return
  }
  func.func @transform_0(%arg0: i32, %arg1: i32) -> (i32, i32, i32) {
    %c0_i32 = arith.constant 0 : i32
    %c0_i32_0 = arith.constant 0 : i32
    %c0_i32_1 = arith.constant 0 : i32
    return %arg0, %c0_i32, %c0_i32_0 : i32, i32, i32
  }
  func.func @transform_1(%arg0: i32, %arg1: i32) -> (i32, i32, i32) {
    %c0_i32 = arith.constant 0 : i32
    %c0_i32_0 = arith.constant 0 : i32
    %c0_i32_1 = arith.constant 0 : i32
    return %arg0, %c0_i32, %c0_i32_0 : i32, i32, i32
  }
  func.func @transform_2(%arg0: i32, %arg1: i32) -> (i32, i32, i32) {
    %c0_i32 = arith.constant 0 : i32
    %c0_i32_0 = arith.constant 0 : i32
    %c0_i32_1 = arith.constant 0 : i32
    return %arg1, %c0_i32, %c0_i32_0 : i32, i32, i32
  }
  func.func @transform_3(%arg0: i32, %arg1: i32) -> (i32, i32, i32) {
    %c0_i32 = arith.constant 0 : i32
    %c0_i32_0 = arith.constant 0 : i32
    %c0_i32_1 = arith.constant 0 : i32
    return %arg1, %c0_i32, %c0_i32_0 : i32, i32, i32
  }
  func.func @transform_4(%arg0: i32, %arg1: i32) -> (i32, i32, i32) {
    %c0_i32 = arith.constant 0 : i32
    %c0_i32_0 = arith.constant 0 : i32
    %c0_i32_1 = arith.constant 0 : i32
    return %arg1, %c0_i32, %c0_i32_0 : i32, i32, i32
  }
  func.func @transform_5(%arg0: i32, %arg1: i32) -> (i32, i32, i32) {
    %c0_i32 = arith.constant 0 : i32
    %c0_i32_0 = arith.constant 0 : i32
    %c0_i32_1 = arith.constant 0 : i32
    return %arg1, %c0_i32, %c0_i32_0 : i32, i32, i32
  }
  func.func @transform_6(%arg0: i32, %arg1: i32) -> (i32, i32, i32) {
    %c0_i32 = arith.constant 0 : i32
    %c0_i32_0 = arith.constant 0 : i32
    %c0_i32_1 = arith.constant 0 : i32
    return %arg1, %c0_i32, %c0_i32_0 : i32, i32, i32
  }
  func.func @transform_7(%arg0: i32, %arg1: i32) -> (i32, i32, i32) {
    %c0_i32 = arith.constant 0 : i32
    %c0_i32_0 = arith.constant 0 : i32
    %c0_i32_1 = arith.constant 0 : i32
    return %arg1, %c0_i32, %c0_i32_0 : i32, i32, i32
  }
  func.func @transform_8(%arg0: i32, %arg1: i32) -> (i32, i32, i32) {
    %c0_i32 = arith.constant 0 : i32
    %c0_i32_0 = arith.constant 0 : i32
    %c0_i32_1 = arith.constant 0 : i32
    return %arg1, %c0_i32, %c0_i32_0 : i32, i32, i32
  }
  func.func @transform_9(%arg0: i32, %arg1: i32) -> (i32, i32, i32) {
    %c0_i32 = arith.constant 0 : i32
    %c0_i32_0 = arith.constant 0 : i32
    %c0_i32_1 = arith.constant 0 : i32
    return %arg0, %c0_i32, %c0_i32_0 : i32, i32, i32
  }
}

</mosaic_0001>

<llo_original>
// kernel: tpu_custom_call.1
$region0: #{tpu_custom_call.1}
  #allocation0 [shape = 'u32[]', space=smem, size = 0x4, offset = 0x4, fixed_abs, tag = 'smem constant byte address 0x4 - core index']
  #allocation1 [shape = 'u32[144,128]{1,0:T(1,128)}', space=vmem, size = 0x12000, scoped, tag = 'internal scratch']
  #allocation2 [shape = 'f32[8,32]{1,0:T(8,128)}', space=vmem, size = 0x1000, scoped, tag = 'scratch operand']
  #allocation3 [shape = 'f32[8,32]{1,0:T(8,128)}', space=vmem, size = 0x1000, scoped, tag = 'scratch operand']
  %s0 = inlined_call_operand.hbm [shape: f32[2,8,32], index: 0, kind: input, shape index: {}]
  %s1 = inlined_call_operand.vmem [shape: f32[2,1,8], index: 1, kind: input, shape index: {}]
  %s2 = inlined_call_operand.vmem [shape: bf16[2,32,96], index: 2, kind: input, shape index: {}]
  %s3 = inlined_call_operand.vmem [shape: bf16[2,32,32], index: 3, kind: input, shape index: {}]
  %s4 = inlined_call_operand.vmem [shape: bf16[2,32,64], index: 4, kind: input, shape index: {}]
  %s5 = inlined_call_operand.vmem [shape: bf16[2,64,32], index: 5, kind: input, shape index: {}]
  %s6 = inlined_call_operand.vmem [shape: f32[2,1,96], index: 6, kind: input, shape index: {}]
  %s7 = inlined_call_operand.vmem [shape: f32[2,1,64], index: 7, kind: input, shape index: {}]
  %s8 = inlined_call_operand.vmem [shape: f32[2,8,32], index: 8, kind: input, shape index: {}]
  %s9 = inlined_call_operand.hbm [shape: f32[2,8,32], index: 9, kind: output, shape index: {}]
  %s10 = sld [smem:[#allocation0]]
  $region81: #{tpu_custom_call.1} parent=0
    _
  %s12 = ssub.s32 1, %s10
  %s13 = scalar_select 0, %s12, %s10
  $region1: #{tpu_custom_call.1} parent=0
    #allocation4 [shape = 'u8[8192]{0}', space=vmem, size = 0x2000, scoped, tag = 'input window, operand 0']
    #allocation5 [shape = 's32[2]{0}', space=sflag, size = 0x8, scoped, tag = 'scoped memory for tpu_custom_call.1']
    #allocation6 [shape = 's32[2]{0}', space=sflag, size = 0x8, scoped, tag = 'scoped memory for tpu_custom_call.1']
    #allocation7 [shape = 'u8[8192]{0}', space=vmem, size = 0x2000, scoped, tag = 'output window, operand 0']
    %14 = vsyncpa [#allocation5], 0
    %s15 = scalar_lea.sflag [#allocation5], 1
    %16 = vsyncpa %s15, 0
    %17 = vsyncpa [#allocation6], 0
    %s18 = scalar_lea.sflag [#allocation6], 1
    %19 = vsyncpa %s18, 0
    loop: start=0, step=1, limit=6
    $region2: #{tpu_custom_call.1} parent=1 // loop_pre_header
      _
    $region3: #{tpu_custom_call.1} parent=1 // loop_header
      %s21 = sphi 0, %s25
      %p22 = scmp.ge.s32.totalorder %s21, 6
      %s28 = sphi 0, %s40
      %s29 = sphi 0, %s36
      %s30 = sphi 0, %s28
      %s31 = sphi 0, %s29
      %s32 = sphi 0, %s30
      %s33 = sphi 0, %s31
      %s43 = sphi 0, %s45
      %s46 = sphi 0, %s43
      %s47 = sphi 0, %s46
      %s63 = sphi 0, %s47
      %s69 = sphi 0, %s71
      %s72 = sphi 0, %s69
      %s73 = sphi 0, %s72
      %s89 = sphi 0, %s73
      %s95 = sphi 0, %s97
      %s98 = sphi 0, %s95
      %s99 = sphi 0, %s98
      %s115 = sphi 0, %s99
      %s121 = sphi 0, %s123
      %s124 = sphi 0, %s121
      %s125 = sphi 0, %s124
      %s141 = sphi 0, %s125
      %s147 = sphi 0, %s149
      %s150 = sphi 0, %s147
      %s151 = sphi 0, %s150
      %s167 = sphi 0, %s151
      %s173 = sphi 0, %s175
      %s176 = sphi 0, %s173
      %s177 = sphi 0, %s176
      %s193 = sphi 0, %s177
      %s199 = sphi 0, %s201
      %s202 = sphi 0, %s199
      %s203 = sphi 0, %s202
      %s219 = sphi 0, %s203
      %s225 = sphi 0, %s227
      %s228 = sphi 0, %s225
      %s229 = sphi 0, %s228
      %s245 = sphi 0, %s229
      %s251 = sphi 0, %s253
      %s254 = sphi 0, %s251
      %s255 = sphi 0, %s254
      %s271 = sphi 0, %s255
      %s277 = sphi 0, %s279
      %s280 = sphi 0, %s277
      %s281 = sphi 0, %s280
      %s297 = sphi 0, %s281
    $region4: #{tpu_custom_call.1} parent=1 // loop_header_branch
      %24 = sbr.rel (%p22) target = $region8
    $region5: #{tpu_custom_call.1} parent=1 // loop_body
      %s26 = ssub.s32 %s21, 1
      %s27 = ssub.s32 %s21, 2
      %s34 = sadd.s32 1, %s29
      %p35 = scmp.ge.s32.totalorder %s34, 2
      %s36 = scalar_select %p35, 0, %s34
      %s37 = sadd.s32 1, %s28
      %s38 = scalar_select %p35, %s37, %s28
      %p39 = scmp.ge.s32.totalorder %s38, 2
      %s40 = scalar_select %p39, 0, %s38
      %s41 = ssub.s32 %s28, %s40
      %p42 = scmp.eq.s32.totalorder %s41, 0
      %s44 = sadd.s32 %s43, 1
      %s45 = scalar_select %p42, %s43, %s44
      %p48 = pneg %p42
      %p49 = scmp.eq.s32.totalorder %s21, 3
      %p50 = por %p48, %p49
      %p51 = scmp.ne.s32.totalorder %s43, %s46
      %p52 = scmp.eq.s32.totalorder %s21, 0
      %p53 = por %p51, %p52
      %p54 = scmp.ne.s32.totalorder %s43, %s46
      %p55 = scmp.eq.s32.totalorder %s26, 3
      %p56 = por %p54, %p55
      %p57 = scmp.ne.s32.totalorder %s46, %s47
      %p58 = scmp.eq.s32.totalorder %s26, 0
      %p59 = por %p57, %p58
      %p60 = scmp.ne.s32.totalorder %s46, %s47
      %p61 = scmp.eq.s32.totalorder %s27, 3
      %p62 = por %p60, %p61
      %p64 = scmp.ne.s32.totalorder %s47, %s63
      %p65 = scmp.eq.s32.totalorder %s27, 0
      %p66 = por %p64, %p65
      %s67 = ssub.s32 %s28, %s40
      %p68 = scmp.eq.s32.totalorder %s67, 0
      %s70 = sadd.s32 %s69, 1
      %s71 = scalar_select %p68, %s69, %s70
      %p74 = pneg %p68
      %p75 = scmp.eq.s32.totalorder %s21, 3
      %p76 = por %p74, %p75
      %p77 = scmp.ne.s32.totalorder %s69, %s72
      %p78 = scmp.eq.s32.totalorder %s21, 0
      %p79 = por %p77, %p78
      %p80 = scmp.ne.s32.totalorder %s69, %s72
      %p81 = scmp.eq.s32.totalorder %s26, 3
      %p82 = por %p80, %p81
      %p83 = scmp.ne.s32.totalorder %s72, %s73
      %p84 = scmp.eq.s32.totalorder %s26, 0
      %p85 = por %p83, %p84
      %p86 = scmp.ne.s32.totalorder %s72, %s73
      %p87 = scmp.eq.s32.totalorder %s27, 3
      %p88 = por %p86, %p87
      %p90 = scmp.ne.s32.totalorder %s73, %s89
      %p91 = scmp.eq.s32.totalorder %s27, 0
      %p92 = por %p90, %p91
      %s93 = ssub.s32 %s29, %s36
      %p94 = scmp.eq.s32.totalorder %s93, 0
      %s96 = sadd.s32 %s95, 1
      %s97 = scalar_select %p94, %s95, %s96
      %p100 = pneg %p94
      %p101 = scmp.eq.s32.totalorder %s21, 3
      %p102 = por %p100, %p101
      %p103 = scmp.ne.s32.totalorder %s95, %s98
      %p104 = scmp.eq.s32.totalorder %s21, 0
      %p105 = por %p103, %p104
      %p106 = scmp.ne.s32.totalorder %s95, %s98
      %p107 = scmp.eq.s32.totalorder %s26, 3
      %p108 = por %p106, %p107
      %p109 = scmp.ne.s32.totalorder %s98, %s99
      %p110 = scmp.eq.s32.totalorder %s26, 0
      %p111 = por %p109, %p110
      %p112 = scmp.ne.s32.totalorder %s98, %s99
      %p113 = scmp.eq.s32.totalorder %s27, 3
      %p114 = por %p112, %p113
      %p116 = scmp.ne.s32.totalorder %s99, %s115
      %p117 = scmp.eq.s32.totalorder %s27, 0
      %p118 = por %p116, %p117
      %s119 = ssub.s32 %s29, %s36
      %p120 = scmp.eq.s32.totalorder %s119, 0
      %s122 = sadd.s32 %s121, 1
      %s123 = scalar_select %p120, %s121, %s122
      %p126 = pneg %p120
      %p127 = scmp.eq.s32.totalorder %s21, 3
      %p128 = por %p126, %p127
      %p129 = scmp.ne.s32.totalorder %s121, %s124
      %p130 = scmp.eq.s32.totalorder %s21, 0
      %p131 = por %p129, %p130
      %p132 = scmp.ne.s32.totalorder %s121, %s124
      %p133 = scmp.eq.s32.totalorder %s26, 3
      %p134 = por %p132, %p133
      %p135 = scmp.ne.s32.totalorder %s124, %s125
      %p136 = scmp.eq.s32.totalorder %s26, 0
      %p137 = por %p135, %p136
      %p138 = scmp.ne.s32.totalorder %s124, %s125
      %p139 = scmp.eq.s32.totalorder %s27, 3
      %p140 = por %p138, %p139
      %p142 = scmp.ne.s32.totalorder %s125, %s141
      %p143 = scmp.eq.s32.totalorder %s27, 0
      %p144 = por %p142, %p143
      %s145 = ssub.s32 %s29, %s36
      %p146 = scmp.eq.s32.totalorder %s145, 0
      %s148 = sadd.s32 %s147, 1
      %s149 = scalar_select %p146, %s147, %s148
      %p152 = pneg %p146
      %p153 = scmp.eq.s32.totalorder %s21, 3
      %p154 = por %p152, %p153
      %p155 = scmp.ne.s32.totalorder %s147, %s150
      %p156 = scmp.eq.s32.totalorder %s21, 0
      %p157 = por %p155, %p156
      %p158 = scmp.ne.s32.totalorder %s147, %s150
      %p159 = scmp.eq.s32.totalorder %s26, 3
      %p160 = por %p158, %p159
      %p161 = scmp.ne.s32.totalorder %s150, %s151
      %p162 = scmp.eq.s32.totalorder %s26, 0
      %p163 = por %p161, %p162
      %p164 = scmp.ne.s32.totalorder %s150, %s151
      %p165 = scmp.eq.s32.totalorder %s27, 3
      %p166 = por %p164, %p165
      %p168 = scmp.ne.s32.totalorder %s151, %s167
      %p169 = scmp.eq.s32.totalorder %s27, 0
      %p170 = por %p168, %p169
      %s171 = ssub.s32 %s29, %s36
      %p172 = scmp.eq.s32.totalorder %s171, 0
      %s174 = sadd.s32 %s173, 1
      %s175 = scalar_select %p172, %s173, %s174
      %p178 = pneg %p172
      %p179 = scmp.eq.s32.totalorder %s21, 3
      %p180 = por %p178, %p179
      %p181 = scmp.ne.s32.totalorder %s173, %s176
      %p182 = scmp.eq.s32.totalorder %s21, 0
      %p183 = por %p181, %p182
      %p184 = scmp.ne.s32.totalorder %s173, %s176
      %p185 = scmp.eq.s32.totalorder %s26, 3
      %p186 = por %p184, %p185
      %p187 = scmp.ne.s32.totalorder %s176, %s177
      %p188 = scmp.eq.s32.totalorder %s26, 0
      %p189 = por %p187, %p188
      %p190 = scmp.ne.s32.totalorder %s176, %s177
      %p191 = scmp.eq.s32.totalorder %s27, 3
      %p192 = por %p190, %p191
      %p194 = scmp.ne.s32.totalorder %s177, %s193
      %p195 = scmp.eq.s32.totalorder %s27, 0
      %p196 = por %p194, %p195
      %s197 = ssub.s32 %s29, %s36
      %p198 = scmp.eq.s32.totalorder %s197, 0
      %s200 = sadd.s32 %s199, 1
      %s201 = scalar_select %p198, %s199, %s200
      %p204 = pneg %p198
      %p205 = scmp.eq.s32.totalorder %s21, 3
      %p206 = por %p204, %p205
      %p207 = scmp.ne.s32.totalorder %s199, %s202
      %p208 = scmp.eq.s32.totalorder %s21, 0
      %p209 = por %p207, %p208
      %p210 = scmp.ne.s32.totalorder %s199, %s202
      %p211 = scmp.eq.s32.totalorder %s26, 3
      %p212 = por %p210, %p211
      %p213 = scmp.ne.s32.totalorder %s202, %s203
      %p214 = scmp.eq.s32.totalorder %s26, 0
      %p215 = por %p213, %p214
      %p216 = scmp.ne.s32.totalorder %s202, %s203
      %p217 = scmp.eq.s32.totalorder %s27, 3
      %p218 = por %p216, %p217
      %p220 = scmp.ne.s32.totalorder %s203, %s219
      %p221 = scmp.eq.s32.totalorder %s27, 0
      %p222 = por %p220, %p221
      %s223 = ssub.s32 %s29, %s36
      %p224 = scmp.eq.s32.totalorder %s223, 0
      %s226 = sadd.s32 %s225, 1
      %s227 = scalar_select %p224, %s225, %s226
      %p230 = pneg %p224
      %p231 = scmp.eq.s32.totalorder %s21, 3
      %p232 = por %p230, %p231
      %p233 = scmp.ne.s32.totalorder %s225, %s228
      %p234 = scmp.eq.s32.totalorder %s21, 0
      %p235 = por %p233, %p234
      %p236 = scmp.ne.s32.totalorder %s225, %s228
      %p237 = scmp.eq.s32.totalorder %s26, 3
      %p238 = por %p236, %p237
      %p239 = scmp.ne.s32.totalorder %s228, %s229
      %p240 = scmp.eq.s32.totalorder %s26, 0
      %p241 = por %p239, %p240
      %p242 = scmp.ne.s32.totalorder %s228, %s229
      %p243 = scmp.eq.s32.totalorder %s27, 3
      %p244 = por %p242, %p243
      %p246 = scmp.ne.s32.totalorder %s229, %s245
      %p247 = scmp.eq.s32.totalorder %s27, 0
      %p248 = por %p246, %p247
      %s249 = ssub.s32 %s29, %s36
      %p250 = scmp.eq.s32.totalorder %s249, 0
      %s252 = sadd.s32 %s251, 1
      %s253 = scalar_select %p250, %s251, %s252
      %p256 = pneg %p250
      %p257 = scmp.eq.s32.totalorder %s21, 3
      %p258 = por %p256, %p257
      %p259 = scmp.ne.s32.totalorder %s251, %s254
      %p260 = scmp.eq.s32.totalorder %s21, 0
      %p261 = por %p259, %p260
      %p262 = scmp.ne.s32.totalorder %s251, %s254
      %p263 = scmp.eq.s32.totalorder %s26, 3
      %p264 = por %p262, %p263
      %p265 = scmp.ne.s32.totalorder %s254, %s255
      %p266 = scmp.eq.s32.totalorder %s26, 0
      %p267 = por %p265, %p266
      %p268 = scmp.ne.s32.totalorder %s254, %s255
      %p269 = scmp.eq.s32.totalorder %s27, 3
      %p270 = por %p268, %p269
      %p272 = scmp.ne.s32.totalorder %s255, %s271
      %p273 = scmp.eq.s32.totalorder %s27, 0
      %p274 = por %p272, %p273
      %s275 = ssub.s32 %s28, %s40
      %p276 = scmp.eq.s32.totalorder %s275, 0
      %s278 = sadd.s32 %s277, 1
      %s279 = scalar_select %p276, %s277, %s278
      %p282 = pneg %p276
      %p283 = scmp.eq.s32.totalorder %s21, 3
      %p284 = por %p282, %p283
      %p285 = scmp.ne.s32.totalorder %s277, %s280
      %p286 = scmp.eq.s32.totalorder %s21, 0
      %p287 = por %p285, %p286
      %p288 = scmp.ne.s32.totalorder %s277, %s280
      %p289 = scmp.eq.s32.totalorder %s26, 3
      %p290 = por %p288, %p289
      %p291 = scmp.ne.s32.totalorder %s280, %s281
      %p292 = scmp.eq.s32.totalorder %s26, 0
      %p293 = por %p291, %p292
      %p294 = scmp.ne.s32.totalorder %s280, %s281
      %p295 = scmp.eq.s32.totalorder %s27, 3
      %p296 = por %p294, %p295
      %p298 = scmp.ne.s32.totalorder %s281, %s297
      %p299 = scmp.eq.s32.totalorder %s27, 0
      %p300 = por %p298, %p299
      %p301 = scmp.le.s32.totalorder 1, %s21
      %p302 = scmp.lt.s32.totalorder %s21, 5
      %p303 = pnand %p301, %p302
      %p304 = pneg %p303
      // Predicated region
      $region9: #{tpu_custom_call.1} parent=5 // pred_check
        _
      $region10: #{tpu_custom_call.1} parent=5 // pred_check_branch
        %306 = sbr.rel (%p303) target = $region12
      $region11: #{tpu_custom_call.1} parent=5 // pred_region
        %s307 = ssub.s32 %s21, 1
      $region12: #{tpu_custom_call.1} parent=5 // pred_fallthru
        _
      %p308 = scmp.lt.s32.totalorder %s21, 4
      // Predicated region
      $region13: #{tpu_custom_call.1} parent=5 // pred_check
        %p309 = pneg %p308
      $region14: #{tpu_custom_call.1} parent=5 // pred_check_branch
        %311 = sbr.rel (%p309) target = $region16
      $region15: #{tpu_custom_call.1} parent=5 // pred_region
        // Predicated region
        $region17: #{tpu_custom_call.1} parent=15 // pred_check
          %p312 = pneg %p53
        $region18: #{tpu_custom_call.1} parent=15 // pred_check_branch
          %314 = sbr.rel (%p312) target = $region20
        $region19: #{tpu_custom_call.1} parent=15 // pred_region
          %s315 = sand.u32 %s43, 1
          %s316 = scalar_lea.sflag [#allocation5], %s315
          %s317 = sand.u32 %s43, 1
          %s318 = smul.addr %s317, 8
          %s319 = scalar_lea.vmem [#allocation4], %s318
          %s321 = ssub.s32 128, 128
          %322 = vsyncadd %s316, %s321
          %s323 = smul.addr %s28, 128
          %s324 = scalar_lea.hbm %s0, %s323
          %s326 = sshll.u32 %s319, 4
          %s327 = int_to_ptr.vmem [resolvable:$true] %s326
          %329 = dma.hbm_to_vmem [thread:$0]  %s324, 128, %s327, %s316
        $region20: #{tpu_custom_call.1} parent=15 // pred_fallthru
          _
        // Predicated region
        $region21: #{tpu_custom_call.1} parent=15 // pred_check
          %p330 = pneg %p79
        $region22: #{tpu_custom_call.1} parent=15 // pred_check_branch
          %332 = sbr.rel (%p330) target = $region24
        $region23: #{tpu_custom_call.1} parent=15 // pred_region
          %p333 = scmp.lt.s32.totalorder %s28, 1
          %s334 = scalar_select %p333, %s28, 1
          %s335 = scalar_lea.vmem %s1, %s334
        $region24: #{tpu_custom_call.1} parent=15 // pred_fallthru
          _
        // Predicated region
        $region25: #{tpu_custom_call.1} parent=15 // pred_check
          %p336 = pneg %p105
        $region26: #{tpu_custom_call.1} parent=15 // pred_check_branch
          %338 = sbr.rel (%p336) target = $region28
        $region27: #{tpu_custom_call.1} parent=15 // pred_region
          %p339 = scmp.lt.s32.totalorder %s29, 1
          %s340 = scalar_select %p339, %s29, 1
          %s341 = smul.addr %s340, 4
          %s342 = smul.addr %s341, 4
          %s343 = scalar_lea.vmem %s2, %s342
        $region28: #{tpu_custom_call.1} parent=15 // pred_fallthru
          _
        // Predicated region
        $region29: #{tpu_custom_call.1} parent=15 // pred_check
          %p344 = pneg %p131
        $region30: #{tpu_custom_call.1} parent=15 // pred_check_branch
          %346 = sbr.rel (%p344) target = $region32
        $region31: #{tpu_custom_call.1} parent=15 // pred_region
          %p347 = scmp.lt.s32.totalorder %s29, 1
          %s348 = scalar_select %p347, %s29, 1
          %s349 = smul.addr %s348, 4
          %s350 = smul.addr %s349, 4
          %s351 = scalar_lea.vmem %s3, %s350
        $region32: #{tpu_custom_call.1} parent=15 // pred_fallthru
          _
        // Predicated region
        $region33: #{tpu_custom_call.1} parent=15 // pred_check
          %p352 = pneg %p157
        $region34: #{tpu_custom_call.1} parent=15 // pred_check_branch
          %354 = sbr.rel (%p352) target = $region36
        $region35: #{tpu_custom_call.1} parent=15 // pred_region
          %p355 = scmp.lt.s32.totalorder %s29, 1
          %s356 = scalar_select %p355, %s29, 1
          %s357 = smul.addr %s356, 4
          %s358 = smul.addr %s357, 4
          %s359 = scalar_lea.vmem %s4, %s358
        $region36: #{tpu_custom_call.1} parent=15 // pred_fallthru
          _
        // Predicated region
        $region37: #{tpu_custom_call.1} parent=15 // pred_check
          %p360 = pneg %p183
        $region38: #{tpu_custom_call.1} parent=15 // pred_check_branch
          %362 = sbr.rel (%p360) target = $region40
        $region39: #{tpu_custom_call.1} parent=15 // pred_region
          %p363 = scmp.lt.s32.totalorder %s29, 1
          %s364 = scalar_select %p363, %s29, 1
          %s365 = smul.addr %s364, 8
          %s366 = smul.addr %s365, 4
          %s367 = scalar_lea.vmem %s5, %s366
        $region40: #{tpu_custom_call.1} parent=15 // pred_fallthru
          _
        // Predicated region
        $region41: #{tpu_custom_call.1} parent=15 // pred_check
          %p368 = pneg %p209
        $region42: #{tpu_custom_call.1} parent=15 // pred_check_branch
          %370 = sbr.rel (%p368) target = $region44
        $region43: #{tpu_custom_call.1} parent=15 // pred_region
          %p371 = scmp.lt.s32.totalorder %s29, 1
          %s372 = scalar_select %p371, %s29, 1
          %s373 = scalar_lea.vmem %s6, %s372
        $region44: #{tpu_custom_call.1} parent=15 // pred_fallthru
          _
        // Predicated region
        $region45: #{tpu_custom_call.1} parent=15 // pred_check
          %p374 = pneg %p235
        $region46: #{tpu_custom_call.1} parent=15 // pred_check_branch
          %376 = sbr.rel (%p374) target = $region48
        $region47: #{tpu_custom_call.1} parent=15 // pred_region
          %p377 = scmp.lt.s32.totalorder %s29, 1
          %s378 = scalar_select %p377, %s29, 1
          %s379 = scalar_lea.vmem %s7, %s378
        $region48: #{tpu_custom_call.1} parent=15 // pred_fallthru
          _
        // Predicated region
        $region49: #{tpu_custom_call.1} parent=15 // pred_check
          %p380 = pneg %p261
        $region50: #{tpu_custom_call.1} parent=15 // pred_check_branch
          %382 = sbr.rel (%p380) target = $region52
        $region51: #{tpu_custom_call.1} parent=15 // pred_region
          %p383 = scmp.lt.s32.totalorder %s29, 1
          %s384 = scalar_select %p383, %s29, 1
          %s385 = smul.addr %s384, 8
          %s386 = scalar_lea.vmem %s8, %s385
        $region52: #{tpu_custom_call.1} parent=15 // pred_fallthru
          _
      $region16: #{tpu_custom_call.1} parent=5 // pred_fallthru
        _
      %p387 = scmp.le.s32.totalorder 1, %s21
      %p388 = scmp.lt.s32.totalorder %s21, 5
      %p389 = pnand %p387, %p388
      %p390 = pneg %p389
      // Predicated region
      $region53: #{tpu_custom_call.1} parent=5 // pred_check
        _
      $region54: #{tpu_custom_call.1} parent=5 // pred_check_branch
        %392 = sbr.rel (%p389) target = $region56
      $region55: #{tpu_custom_call.1} parent=5 // pred_region
        %s393 = ssub.s32 %s21, 1
        %s394 = sand.u32 %s46, 1
        %s395 = scalar_lea.sflag [#allocation5], %s394
        %s396 = sand.u32 %s46, 1
        %s397 = smul.addr %s396, 8
        %s398 = scalar_lea.vmem [#allocation4], %s397
        // Predicated region
        $region57: #{tpu_custom_call.1} parent=55 // pred_check
          %p399 = pneg %p59
        $region58: #{tpu_custom_call.1} parent=55 // pred_check_branch
          %401 = sbr.rel (%p399) target = $region60
        $region59: #{tpu_custom_call.1} parent=55 // pred_region
          %402 = dma.done %s395, 128
        $region60: #{tpu_custom_call.1} parent=55 // pred_fallthru
          _
        %s403 = sand.u32 %s46, 1
        %s404 = scalar_lea.sflag [#allocation5], %s403
        %s405 = sand.u32 %s46, 1
        %s406 = smul.addr %s405, 8
        %s407 = scalar_lea.vmem [#allocation4], %s406
        %p408 = pneg %p59
        %p409 = pneg %p56
        %p410 = scmp.lt.s32.totalorder %s30, 1
        %s411 = scalar_select %p410, %s30, 1
        %s412 = scalar_lea.vmem %s1, %s411
        %p413 = pneg %p85
        %p414 = pneg %p82
        %p415 = scmp.lt.s32.totalorder %s31, 1
        %s416 = scalar_select %p415, %s31, 1
        %s417 = smul.addr %s416, 4
        %s418 = smul.addr %s417, 4
        %s419 = scalar_lea.vmem %s2, %s418
        %p420 = pneg %p111
        %p421 = pneg %p108
        %p422 = scmp.lt.s32.totalorder %s31, 1
        %s423 = scalar_select %p422, %s31, 1
        %s424 = smul.addr %s423, 4
        %s425 = smul.addr %s424, 4
        %s426 = scalar_lea.vmem %s3, %s425
        %p427 = pneg %p137
        %p428 = pneg %p134
        %p429 = scmp.lt.s32.totalorder %s31, 1
        %s430 = scalar_select %p429, %s31, 1
        %s431 = smul.addr %s430, 4
        %s432 = smul.addr %s431, 4
        %s433 = scalar_lea.vmem %s4, %s432
        %p434 = pneg %p163
        %p435 = pneg %p160
        %p436 = scmp.lt.s32.totalorder %s31, 1
        %s437 = scalar_select %p436, %s31, 1
        %s438 = smul.addr %s437, 8
        %s439 = smul.addr %s438, 4
        %s440 = scalar_lea.vmem %s5, %s439
        %p441 = pneg %p189
        %p442 = pneg %p186
        %p443 = scmp.lt.s32.totalorder %s31, 1
        %s444 = scalar_select %p443, %s31, 1
        %s445 = scalar_lea.vmem %s6, %s444
        %p446 = pneg %p215
        %p447 = pneg %p212
        %p448 = scmp.lt.s32.totalorder %s31, 1
        %s449 = scalar_select %p448, %s31, 1
        %s450 = scalar_lea.vmem %s7, %s449
        %p451 = pneg %p241
        %p452 = pneg %p238
        %p453 = scmp.lt.s32.totalorder %s31, 1
        %s454 = scalar_select %p453, %s31, 1
        %s455 = smul.addr %s454, 8
        %s456 = scalar_lea.vmem %s8, %s455
        %p457 = pneg %p267
        %p458 = pneg %p264
        %p459 = pneg %p293
        %p460 = pneg %p290
        %s461 = sand.u32 %s280, 1
        %s462 = scalar_lea.sflag [#allocation6], %s461
        %s463 = sand.u32 %s280, 1
        %s464 = smul.addr %s463, 8
        %s465 = scalar_lea.vmem [#allocation7], %s464
        %p466 = scmp.lt.s32.totalorder %s30, 1
        %s467 = scalar_select %p466, %s30, 1
        %s468 = scalar_lea.vmem %s1, %s467
        %p469 = scmp.lt.s32.totalorder %s31, 1
        %s470 = scalar_select %p469, %s31, 1
        %s471 = smul.addr %s470, 4
        %s472 = smul.addr %s471, 4
        %s473 = scalar_lea.vmem %s2, %s472
        %p474 = scmp.lt.s32.totalorder %s31, 1
        %s475 = scalar_select %p474, %s31, 1
        %s476 = smul.addr %s475, 4
        %s477 = smul.addr %s476, 4
        %s478 = scalar_lea.vmem %s3, %s477
        %p479 = scmp.lt.s32.totalorder %s31, 1
        %s480 = scalar_select %p479, %s31, 1
        %s481 = smul.addr %s480, 4
        %s482 = smul.addr %s481, 4
        %s483 = scalar_lea.vmem %s4, %s482
        %p484 = scmp.lt.s32.totalorder %s31, 1
        %s485 = scalar_select %p484, %s31, 1
        %s486 = smul.addr %s485, 8
        %s487 = smul.addr %s486, 4
        %s488 = scalar_lea.vmem %s5, %s487
        %p489 = scmp.lt.s32.totalorder %s31, 1
        %s490 = scalar_select %p489, %s31, 1
        %s491 = scalar_lea.vmem %s6, %s490
        %p492 = scmp.lt.s32.totalorder %s31, 1
        %s493 = scalar_select %p492, %s31, 1
        %s494 = scalar_lea.vmem %s7, %s493
        %p495 = scmp.lt.s32.totalorder %s31, 1
        %s496 = scalar_select %p495, %s31, 1
        %s497 = smul.addr %s496, 8
        %s498 = scalar_lea.vmem %s8, %s497
        %p500 = scmp.eq.s32.totalorder %s31, 0
        // Predicated region
        $region61: #{tpu_custom_call.1} parent=55 // pred_check
          %p501 = pneg %p500
        $region62: #{tpu_custom_call.1} parent=55 // pred_check_branch
          %503 = sbr.rel (%p501) target = $region64
        $region63: #{tpu_custom_call.1} parent=55 // pred_region
          %v504 = vld [vmem:[%s398] sm:$0xff]
          %vm505 = vcmask 261120
          %506 = vst.msk [vmem:[#allocation2] sm:$0xff] %vm505, %v504
        $region64: #{tpu_custom_call.1} parent=55 // pred_fallthru
          _
        %v507 = vld [vmem:[#allocation2] sm:$0xff]
        %v508 = vld [vmem:[%s468] sm:$0x1]
        %v509 = vld [vmem:[%s498] sm:$0xff]
        %v510 = vpack.c.bf16 %v507, %v507
        %v511 = vld [vmem:[%s473] sm:$0xf]
        %v512 = vld [vmem:[%s473 + $0x4] sm:$0xf]
        %v513 = vld [vmem:[%s473 + $0x8] sm:$0xf]
        %v514 = vld [vmem:[%s473 + $0xc] sm:$0xf]
        %v515 = vld [vmem:[%s491] sm:$0x1]
        %v517 = vlaneseq
        %v518 = vshrl.u32 %v517, 7
        %v519 = vsub.s32 0, %v518
        %v520 = vrot.slane %v515, %v519
        %v526 = vunpack.c.l.b16 %v511
        %v527 = vunpack.c.l.b16 %v512
        %v528 = vunpack.c.l.b16 %v513
        %v529 = vunpack.c.l.b16 %v514
        %v530 = vpack.c.b16 %v527, %v526
        %v531 = vpack.c.b16 %v529, %v528
        %vm534 = vcmask 261120
        %v536 = vsel %vm534, %v510, 0
        %538 = vmatprep.subr.bf16.mxu0 0
        %539 = vmatpush1.bf16.msra.mxu0 %v530
        %540 = vmatprep.subr.bf16.mxu0 0
        %541 = vmatpush1.bf16.msra.mxu0 %v531
        %542 = vmatprep.subr.bf16.mxu0 0
        %543 = vmatpush1.bf16.msra.mxu0 0
        %544 = vmatprep.subr.bf16.mxu0 0
        %545 = vmatpush1.bf16.msra.mxu0 0
        %546 = vmatprep.subr.bf16.mxu0 0
        %547 = vmatpush1.bf16.msra.mxu0 0
        %548 = vmatprep.subr.bf16.mxu0 0
        %549 = vmatpush1.bf16.msra.mxu0 0
        %550 = vmatprep.subr.bf16.mxu0 0
        %551 = vmatpush1.bf16.msra.mxu0 0
        %552 = vmatprep.subr.bf16.mxu0 0
        %553 = vmatpush1.bf16.msra.mxu0 0
        %554 = vmatprep.subr.bf16.mxu0 0
        %555 = vmatpush1.bf16.msra.mxu0 0
        %556 = vmatprep.subr.bf16.mxu0 0
        %557 = vmatpush1.bf16.msra.mxu0 0
        %558 = vmatprep.subr.bf16.mxu0 0
        %559 = vmatpush1.bf16.msra.mxu0 0
        %560 = vmatprep.subr.bf16.mxu0 0
        %561 = vmatpush1.bf16.msra.mxu0 0
        %562 = vmatprep.subr.bf16.mxu0 0
        %563 = vmatpush1.bf16.msra.mxu0 0
        %564 = vmatprep.subr.bf16.mxu0 0
        %565 = vmatpush1.bf16.msra.mxu0 0
        %566 = vmatprep.subr.bf16.mxu0 0
        %567 = vmatpush1.bf16.msra.mxu0 0
        %568 = vmatprep.subr.bf16.mxu0 0
        %569 = vmatpush1.bf16.msra.mxu0 0
        %570 = vmatprep.mubr.bf16.mxu0 0
        %571 = vmatmul.mubr.bf16.gmra.mrb[0].mxu0 %v536
        %v572 = vpop.f32.mrb[0].mxu0
        %v573 = vadd.f32 %v520, %v572
        %v574 = vpop.f32.mrb[0].mxu0
        %v575 = vpop.f32.mrb[0].mxu0
        %v576 = vpop.f32.mrb[0].mxu0
        %577 = vdwg.mxu0
        %v578 = vmul.f32 %v573, 0.35355338
        %v579 = vpack.c.bf16 %v578, %v578
        %v580 = vpack.c.bf16 %v573, %v573
        %v582 = vlaneseq
        %v583 = vshrl.u32 %v582, 7
        %v584 = vsub.s32 0, %v583
        %v585 = vrot.slane %v508, %v584
        %588 = vrot.lane.b32.xlu0 %v580, 96
        %v589 = vpop.permute.xlu0 %588
        %vm590 = vcmask 64512
        %v592 = vsel %vm590, %v579, 0
        %v595 = vsel %vm590, %v589, 0
        %597 = vmatprep.subr.bf16.mxu0 0
        %598 = vmatpush1.bf16.xpose.msra.mxu0 %v595
        %599 = vmatprep.subr.bf16.mxu0 0
        %600 = vmatpush1.bf16.xpose.msra.mxu0 0
        %601 = vmatprep.subr.bf16.mxu0 0
        %602 = vmatpush1.bf16.xpose.msra.mxu0 0
        %603 = vmatprep.subr.bf16.mxu0 0
        %604 = vmatpush1.bf16.xpose.msra.mxu0 0
        %605 = vmatprep.subr.bf16.mxu0 0
        %606 = vmatpush1.bf16.xpose.msra.mxu0 0
        %607 = vmatprep.subr.bf16.mxu0 0
        %608 = vmatpush1.bf16.xpose.msra.mxu0 0
        %609 = vmatprep.subr.bf16.mxu0 0
        %610 = vmatpush1.bf16.xpose.msra.mxu0 0
        %611 = vmatprep.subr.bf16.mxu0 0
        %612 = vmatpush1.bf16.xpose.msra.mxu0 0
        %613 = vmatprep.subr.bf16.mxu0 0
        %614 = vmatpush1.bf16.xpose.msra.mxu0 0
        %615 = vmatprep.subr.bf16.mxu0 0
        %616 = vmatpush1.bf16.xpose.msra.mxu0 0
        %617 = vmatprep.subr.bf16.mxu0 0
        %618 = vmatpush1.bf16.xpose.msra.mxu0 0
        %619 = vmatprep.subr.bf16.mxu0 0
        %620 = vmatpush1.bf16.xpose.msra.mxu0 0
        %621 = vmatprep.subr.bf16.mxu0 0
        %622 = vmatpush1.bf16.xpose.msra.mxu0 0
        %623 = vmatprep.subr.bf16.mxu0 0
        %624 = vmatpush1.bf16.xpose.msra.mxu0 0
        %625 = vmatprep.subr.bf16.mxu0 0
        %626 = vmatpush1.bf16.xpose.msra.mxu0 0
        %627 = vmatprep.subr.bf16.mxu0 0
        %628 = vmatpush1.bf16.xpose.msra.mxu0 0
        %629 = vmatprep.mubr.bf16.mxu0 0
        %630 = vmatmul.mubr.bf16.gmra.mrb[0].mxu0 %v592
        %v631 = vpop.f32.mrb[0].mxu0
        %v632 = vadd.f32 %v585, %v631
        %v633 = vpop.f32.mrb[0].mxu0
        %v634 = vpop.f32.mrb[0].mxu0
        %v635 = vpop.f32.mrb[0].mxu0
        %636 = vdwg.mxu0
        %v637 = vsel %vm590, %v632, -inf
        %638 = vmax.xlane.f32.xlu0 %v637
        %v639 = vpop.xlane.xlu0 %638
        %v640 = vsub.f32 %v632, %v639
        %v641 = vmul.f32 %v640, 1.442695
        %v642 = vpow.pop %v641
        %v643 = vsel %vm590, %v642, 0.0
        %644 = vadd.xlane.f32.xlu0 %v643
        %v645 = vpop.xlane.xlu0 %644
        %v646 = vrcp.pop %v645
        %v647 = vmul.f32 %v642, %v646
        %v648 = vpack.c.bf16 %v647, %v647
        %649 = vrot.lane.b32.xlu0 %v580, 64
        %v650 = vpop.permute.xlu0 %649
        %v652 = vsel %vm590, %v648, 0
        %vm654 = vcmask 1043456
        %v656 = vsel %vm654, %v650, 0
        %658 = vmatprep.subr.bf16.mxu0 0
        %659 = vmatpush1.bf16.msra.mxu0 %v656
        %660 = vmatprep.subr.bf16.mxu0 0
        %661 = vmatpush1.bf16.msra.mxu0 0
        %662 = vmatprep.subr.bf16.mxu0 0
        %663 = vmatpush1.bf16.msra.mxu0 0
        %664 = vmatprep.subr.bf16.mxu0 0
        %665 = vmatpush1.bf16.msra.mxu0 0
        %666 = vmatprep.subr.bf16.mxu0 0
        %667 = vmatpush1.bf16.msra.mxu0 0
        %668 = vmatprep.subr.bf16.mxu0 0
        %669 = vmatpush1.bf16.msra.mxu0 0
        %670 = vmatprep.subr.bf16.mxu0 0
        %671 = vmatpush1.bf16.msra.mxu0 0
        %672 = vmatprep.subr.bf16.mxu0 0
        %673 = vmatpush1.bf16.msra.mxu0 0
        %674 = vmatprep.subr.bf16.mxu0 0
        %675 = vmatpush1.bf16.msra.mxu0 0
        %676 = vmatprep.subr.bf16.mxu0 0
        %677 = vmatpush1.bf16.msra.mxu0 0
        %678 = vmatprep.subr.bf16.mxu0 0
        %679 = vmatpush1.bf16.msra.mxu0 0
        %680 = vmatprep.subr.bf16.mxu0 0
        %681 = vmatpush1.bf16.msra.mxu0 0
        %682 = vmatprep.subr.bf16.mxu0 0
        %683 = vmatpush1.bf16.msra.mxu0 0
        %684 = vmatprep.subr.bf16.mxu0 0
        %685 = vmatpush1.bf16.msra.mxu0 0
        %686 = vmatprep.subr.bf16.mxu0 0
        %687 = vmatpush1.bf16.msra.mxu0 0
        %688 = vmatprep.subr.bf16.mxu0 0
        %689 = vmatpush1.bf16.msra.mxu0 0
        %690 = vmatprep.mubr.bf16.mxu0 0
        %691 = vmatmul.mubr.bf16.gmra.mrb[0].mxu0 %v652
        %v692 = vpop.f32.mrb[0].mxu0
        %v693 = vadd.f32 0.0, %v692
        %v694 = vpop.f32.mrb[0].mxu0
        %v695 = vpop.f32.mrb[0].mxu0
        %v696 = vpop.f32.mrb[0].mxu0
        %697 = vdwg.mxu0
        %698 = vst.msk [vmem:[#allocation3] sm:$0xff] %vm590, %v693
        %700 = vrot.lane.b32.xlu0 %v579, 120
        %v701 = vpop.permute.xlu0 %700
        %702 = vrot.lane.b32.xlu0 %v580, 88
        %v703 = vpop.permute.xlu0 %702
        %v705 = vsel %vm590, %v701, 0
        %v708 = vsel %vm590, %v703, 0
        %710 = vmatprep.subr.bf16.mxu0 0
        %711 = vmatpush1.bf16.xpose.msra.mxu0 %v708
        %712 = vmatprep.subr.bf16.mxu0 0
        %713 = vmatpush1.bf16.xpose.msra.mxu0 0
        %714 = vmatprep.subr.bf16.mxu0 0
        %715 = vmatpush1.bf16.xpose.msra.mxu0 0
        %716 = vmatprep.subr.bf16.mxu0 0
        %717 = vmatpush1.bf16.xpose.msra.mxu0 0
        %718 = vmatprep.subr.bf16.mxu0 0
        %719 = vmatpush1.bf16.xpose.msra.mxu0 0
        %720 = vmatprep.subr.bf16.mxu0 0
        %721 = vmatpush1.bf16.xpose.msra.mxu0 0
        %722 = vmatprep.subr.bf16.mxu0 0
        %723 = vmatpush1.bf16.xpose.msra.mxu0 0
        %724 = vmatprep.subr.bf16.mxu0 0
        %725 = vmatpush1.bf16.xpose.msra.mxu0 0
        %726 = vmatprep.subr.bf16.mxu0 0
        %727 = vmatpush1.bf16.xpose.msra.mxu0 0
        %728 = vmatprep.subr.bf16.mxu0 0
        %729 = vmatpush1.bf16.xpose.msra.mxu0 0
        %730 = vmatprep.subr.bf16.mxu0 0
        %731 = vmatpush1.bf16.xpose.msra.mxu0 0
        %732 = vmatprep.subr.bf16.mxu0 0
        %733 = vmatpush1.bf16.xpose.msra.mxu0 0
        %734 = vmatprep.subr.bf16.mxu0 0
        %735 = vmatpush1.bf16.xpose.msra.mxu0 0
        %736 = vmatprep.subr.bf16.mxu0 0
        %737 = vmatpush1.bf16.xpose.msra.mxu0 0
        %738 = vmatprep.subr.bf16.mxu0 0
        %739 = vmatpush1.bf16.xpose.msra.mxu0 0
        %740 = vmatprep.subr.bf16.mxu0 0
        %741 = vmatpush1.bf16.xpose.msra.mxu0 0
        %742 = vmatprep.mubr.bf16.mxu0 0
        %743 = vmatmul.mubr.bf16.gmra.mrb[0].mxu0 %v705
        %v744 = vpop.f32.mrb[0].mxu0
        %v745 = vadd.f32 %v585, %v744
        %v746 = vpop.f32.mrb[0].mxu0
        %v747 = vpop.f32.mrb[0].mxu0
        %v748 = vpop.f32.mrb[0].mxu0
        %749 = vdwg.mxu0
        %v750 = vsel %vm590, %v745, -inf
        %751 = vmax.xlane.f32.xlu0 %v750
        %v752 = vpop.xlane.xlu0 %751
        %v753 = vsub.f32 %v745, %v752
        %v754 = vmul.f32 %v753, 1.442695
        %v755 = vpow.pop %v754
        %v756 = vsel %vm590, %v755, 0.0
        %757 = vadd.xlane.f32.xlu0 %v756
        %v758 = vpop.xlane.xlu0 %757
        %v759 = vrcp.pop %v758
        %v760 = vmul.f32 %v755, %v759
        %v761 = vpack.c.bf16 %v760, %v760
        %762 = vrot.lane.b32.xlu0 %v580, 56
        %v763 = vpop.permute.xlu0 %762
        %v765 = vsel %vm590, %v761, 0
        %v768 = vsel %vm654, %v763, 0
        %770 = vmatprep.subr.bf16.mxu0 0
        %771 = vmatpush1.bf16.msra.mxu0 %v768
        %772 = vmatprep.subr.bf16.mxu0 0
        %773 = vmatpush1.bf16.msra.mxu0 0
        %774 = vmatprep.subr.bf16.mxu0 0
        %775 = vmatpush1.bf16.msra.mxu0 0
        %776 = vmatprep.subr.bf16.mxu0 0
        %777 = vmatpush1.bf16.msra.mxu0 0
        %778 = vmatprep.subr.bf16.mxu0 0
        %779 = vmatpush1.bf16.msra.mxu0 0
        %780 = vmatprep.subr.bf16.mxu0 0
        %781 = vmatpush1.bf16.msra.mxu0 0
        %782 = vmatprep.subr.bf16.mxu0 0
        %783 = vmatpush1.bf16.msra.mxu0 0
        %784 = vmatprep.subr.bf16.mxu0 0
        %785 = vmatpush1.bf16.msra.mxu0 0
        %786 = vmatprep.subr.bf16.mxu0 0
        %787 = vmatpush1.bf16.msra.mxu0 0
        %788 = vmatprep.subr.bf16.mxu0 0
        %789 = vmatpush1.bf16.msra.mxu0 0
        %790 = vmatprep.subr.bf16.mxu0 0
        %791 = vmatpush1.bf16.msra.mxu0 0
        %792 = vmatprep.subr.bf16.mxu0 0
        %793 = vmatpush1.bf16.msra.mxu0 0
        %794 = vmatprep.subr.bf16.mxu0 0
        %795 = vmatpush1.bf16.msra.mxu0 0
        %796 = vmatprep.subr.bf16.mxu0 0
        %797 = vmatpush1.bf16.msra.mxu0 0
        %798 = vmatprep.subr.bf16.mxu0 0
        %799 = vmatpush1.bf16.msra.mxu0 0
        %800 = vmatprep.subr.bf16.mxu0 0
        %801 = vmatpush1.bf16.msra.mxu0 0
        %802 = vmatprep.mubr.bf16.mxu0 0
        %803 = vmatmul.mubr.bf16.gmra.mrb[0].mxu0 %v765
        %v804 = vpop.f32.mrb[0].mxu0
        %v805 = vadd.f32 0.0, %v804
        %v806 = vpop.f32.mrb[0].mxu0
        %v807 = vpop.f32.mrb[0].mxu0
        %v808 = vpop.f32.mrb[0].mxu0
        %809 = vdwg.mxu0
        %811 = vrot.lane.b32.xlu0 %v805, 8
        %v812 = vpop.permute.xlu0 %811
        %vm814 = vcmask 130112
        %815 = vst.msk [vmem:[#allocation3] sm:$0xff] %vm814, %v812
        %816 = vrot.lane.b32.xlu0 %v579, 112
        %v817 = vpop.permute.xlu0 %816
        %818 = vrot.lane.b32.xlu0 %v580, 80
        %v819 = vpop.permute.xlu0 %818
        %v821 = vsel %vm590, %v817, 0
        %v824 = vsel %vm590, %v819, 0
        %826 = vmatprep.subr.bf16.mxu0 0
        %827 = vmatpush1.bf16.xpose.msra.mxu0 %v824
        %828 = vmatprep.subr.bf16.mxu0 0
        %829 = vmatpush1.bf16.xpose.msra.mxu0 0
        %830 = vmatprep.subr.bf16.mxu0 0
        %831 = vmatpush1.bf16.xpose.msra.mxu0 0
        %832 = vmatprep.subr.bf16.mxu0 0
        %833 = vmatpush1.bf16.xpose.msra.mxu0 0
        %834 = vmatprep.subr.bf16.mxu0 0
        %835 = vmatpush1.bf16.xpose.msra.mxu0 0
        %836 = vmatprep.subr.bf16.mxu0 0
        %837 = vmatpush1.bf16.xpose.msra.mxu0 0
        %838 = vmatprep.subr.bf16.mxu0 0
        %839 = vmatpush1.bf16.xpose.msra.mxu0 0
        %840 = vmatprep.subr.bf16.mxu0 0
        %841 = vmatpush1.bf16.xpose.msra.mxu0 0
        %842 = vmatprep.subr.bf16.mxu0 0
        %843 = vmatpush1.bf16.xpose.msra.mxu0 0
        %844 = vmatprep.subr.bf16.mxu0 0
        %845 = vmatpush1.bf16.xpose.msra.mxu0 0
        %846 = vmatprep.subr.bf16.mxu0 0
        %847 = vmatpush1.bf16.xpose.msra.mxu0 0
        %848 = vmatprep.subr.bf16.mxu0 0
        %849 = vmatpush1.bf16.xpose.msra.mxu0 0
        %850 = vmatprep.subr.bf16.mxu0 0
        %851 = vmatpush1.bf16.xpose.msra.mxu0 0
        %852 = vmatprep.subr.bf16.mxu0 0
        %853 = vmatpush1.bf16.xpose.msra.mxu0 0
        %854 = vmatprep.subr.bf16.mxu0 0
        %855 = vmatpush1.bf16.xpose.msra.mxu0 0
        %856 = vmatprep.subr.bf16.mxu0 0
        %857 = vmatpush1.bf16.xpose.msra.mxu0 0
        %858 = vmatprep.mubr.bf16.mxu0 0
        %859 = vmatmul.mubr.bf16.gmra.mrb[0].mxu0 %v821
        %v860 = vpop.f32.mrb[0].mxu0
        %v861 = vadd.f32 %v585, %v860
        %v862 = vpop.f32.mrb[0].mxu0
        %v863 = vpop.f32.mrb[0].mxu0
        %v864 = vpop.f32.mrb[0].mxu0
        %865 = vdwg.mxu0
        %v866 = vsel %vm590, %v861, -inf
        %867 = vmax.xlane.f32.xlu0 %v866
        %v868 = vpop.xlane.xlu0 %867
        %v869 = vsub.f32 %v861, %v868
        %v870 = vmul.f32 %v869, 1.442695
        %v871 = vpow.pop %v870
        %v872 = vsel %vm590, %v871, 0.0
        %873 = vadd.xlane.f32.xlu0 %v872
        %v874 = vpop.xlane.xlu0 %873
        %v875 = vrcp.pop %v874
        %v876 = vmul.f32 %v871, %v875
        %v877 = vpack.c.bf16 %v876, %v876
        %878 = vrot.lane.b32.xlu0 %v580, 48
        %v879 = vpop.permute.xlu0 %878
        %v881 = vsel %vm590, %v877, 0
        %v884 = vsel %vm654, %v879, 0
        %886 = vmatprep.subr.bf16.mxu0 0
        %887 = vmatpush1.bf16.msra.mxu0 %v884
        %888 = vmatprep.subr.bf16.mxu0 0
        %889 = vmatpush1.bf16.msra.mxu0 0
        %890 = vmatprep.subr.bf16.mxu0 0
        %891 = vmatpush1.bf16.msra.mxu0 0
        %892 = vmatprep.subr.bf16.mxu0 0
        %893 = vmatpush1.bf16.msra.mxu0 0
        %894 = vmatprep.subr.bf16.mxu0 0
        %895 = vmatpush1.bf16.msra.mxu0 0
        %896 = vmatprep.subr.bf16.mxu0 0
        %897 = vmatpush1.bf16.msra.mxu0 0
        %898 = vmatprep.subr.bf16.mxu0 0
        %899 = vmatpush1.bf16.msra.mxu0 0
        %900 = vmatprep.subr.bf16.mxu0 0
        %901 = vmatpush1.bf16.msra.mxu0 0
        %902 = vmatprep.subr.bf16.mxu0 0
        %903 = vmatpush1.bf16.msra.mxu0 0
        %904 = vmatprep.subr.bf16.mxu0 0
        %905 = vmatpush1.bf16.msra.mxu0 0
        %906 = vmatprep.subr.bf16.mxu0 0
        %907 = vmatpush1.bf16.msra.mxu0 0
        %908 = vmatprep.subr.bf16.mxu0 0
        %909 = vmatpush1.bf16.msra.mxu0 0
        %910 = vmatprep.subr.bf16.mxu0 0
        %911 = vmatpush1.bf16.msra.mxu0 0
        %912 = vmatprep.subr.bf16.mxu0 0
        %913 = vmatpush1.bf16.msra.mxu0 0
        %914 = vmatprep.subr.bf16.mxu0 0
        %915 = vmatpush1.bf16.msra.mxu0 0
        %916 = vmatprep.subr.bf16.mxu0 0
        %917 = vmatpush1.bf16.msra.mxu0 0
        %918 = vmatprep.mubr.bf16.mxu0 0
        %919 = vmatmul.mubr.bf16.gmra.mrb[0].mxu0 %v881
        %v920 = vpop.f32.mrb[0].mxu0
        %v921 = vadd.f32 0.0, %v920
        %v922 = vpop.f32.mrb[0].mxu0
        %v923 = vpop.f32.mrb[0].mxu0
        %v924 = vpop.f32.mrb[0].mxu0
        %925 = vdwg.mxu0
        %927 = vrot.lane.b32.xlu0 %v921, 16
        %v928 = vpop.permute.xlu0 %927
        %vm930 = vcmask 195712
        %931 = vst.msk [vmem:[#allocation3] sm:$0xff] %vm930, %v928
        %932 = vrot.lane.b32.xlu0 %v579, 104
        %v933 = vpop.permute.xlu0 %932
        %934 = vrot.lane.b32.xlu0 %v580, 72
        %v935 = vpop.permute.xlu0 %934
        %v937 = vsel %vm590, %v933, 0
        %v940 = vsel %vm590, %v935, 0
        %942 = vmatprep.subr.bf16.mxu0 0
        %943 = vmatpush1.bf16.xpose.msra.mxu0 %v940
        %944 = vmatprep.subr.bf16.mxu0 0
        %945 = vmatpush1.bf16.xpose.msra.mxu0 0
        %946 = vmatprep.subr.bf16.mxu0 0
        %947 = vmatpush1.bf16.xpose.msra.mxu0 0
        %948 = vmatprep.subr.bf16.mxu0 0
        %949 = vmatpush1.bf16.xpose.msra.mxu0 0
        %950 = vmatprep.subr.bf16.mxu0 0
        %951 = vmatpush1.bf16.xpose.msra.mxu0 0
        %952 = vmatprep.subr.bf16.mxu0 0
        %953 = vmatpush1.bf16.xpose.msra.mxu0 0
        %954 = vmatprep.subr.bf16.mxu0 0
        %955 = vmatpush1.bf16.xpose.msra.mxu0 0
        %956 = vmatprep.subr.bf16.mxu0 0
        %957 = vmatpush1.bf16.xpose.msra.mxu0 0
        %958 = vmatprep.subr.bf16.mxu0 0
        %959 = vmatpush1.bf16.xpose.msra.mxu0 0
        %960 = vmatprep.subr.bf16.mxu0 0
        %961 = vmatpush1.bf16.xpose.msra.mxu0 0
        %962 = vmatprep.subr.bf16.mxu0 0
        %963 = vmatpush1.bf16.xpose.msra.mxu0 0
        %964 = vmatprep.subr.bf16.mxu0 0
        %965 = vmatpush1.bf16.xpose.msra.mxu0 0
        %966 = vmatprep.subr.bf16.mxu0 0
        %967 = vmatpush1.bf16.xpose.msra.mxu0 0
        %968 = vmatprep.subr.bf16.mxu0 0
        %969 = vmatpush1.bf16.xpose.msra.mxu0 0
        %970 = vmatprep.subr.bf16.mxu0 0
        %971 = vmatpush1.bf16.xpose.msra.mxu0 0
        %972 = vmatprep.subr.bf16.mxu0 0
        %973 = vmatpush1.bf16.xpose.msra.mxu0 0
        %974 = vmatprep.mubr.bf16.mxu0 0
        %975 = vmatmul.mubr.bf16.gmra.mrb[0].mxu0 %v937
        %v976 = vpop.f32.mrb[0].mxu0
        %v977 = vadd.f32 %v585, %v976
        %v978 = vpop.f32.mrb[0].mxu0
        %v979 = vpop.f32.mrb[0].mxu0
        %v980 = vpop.f32.mrb[0].mxu0
        %981 = vdwg.mxu0
        %v982 = vsel %vm590, %v977, -inf
        %983 = vmax.xlane.f32.xlu0 %v982
        %v984 = vpop.xlane.xlu0 %983
        %v985 = vsub.f32 %v977, %v984
        %v986 = vmul.f32 %v985, 1.442695
        %v987 = vpow.pop %v986
        %v988 = vsel %vm590, %v987, 0.0
        %989 = vadd.xlane.f32.xlu0 %v988
        %v990 = vpop.xlane.xlu0 %989
        %v991 = vrcp.pop %v990
        %v992 = vmul.f32 %v987, %v991
        %v993 = vpack.c.bf16 %v992, %v992
        %994 = vrot.lane.b32.xlu0 %v580, 40
        %v995 = vpop.permute.xlu0 %994
        %v997 = vsel %vm590, %v993, 0
        %v1000 = vsel %vm654, %v995, 0
        %1002 = vmatprep.subr.bf16.mxu0 0
        %1003 = vmatpush1.bf16.msra.mxu0 %v1000
        %1004 = vmatprep.subr.bf16.mxu0 0
        %1005 = vmatpush1.bf16.msra.mxu0 0
        %1006 = vmatprep.subr.bf16.mxu0 0
        %1007 = vmatpush1.bf16.msra.mxu0 0
        %1008 = vmatprep.subr.bf16.mxu0 0
        %1009 = vmatpush1.bf16.msra.mxu0 0
        %1010 = vmatprep.subr.bf16.mxu0 0
        %1011 = vmatpush1.bf16.msra.mxu0 0
        %1012 = vmatprep.subr.bf16.mxu0 0
        %1013 = vmatpush1.bf16.msra.mxu0 0
        %1014 = vmatprep.subr.bf16.mxu0 0
        %1015 = vmatpush1.bf16.msra.mxu0 0
        %1016 = vmatprep.subr.bf16.mxu0 0
        %1017 = vmatpush1.bf16.msra.mxu0 0
        %1018 = vmatprep.subr.bf16.mxu0 0
        %1019 = vmatpush1.bf16.msra.mxu0 0
        %1020 = vmatprep.subr.bf16.mxu0 0
        %1021 = vmatpush1.bf16.msra.mxu0 0
        %1022 = vmatprep.subr.bf16.mxu0 0
        %1023 = vmatpush1.bf16.msra.mxu0 0
        %1024 = vmatprep.subr.bf16.mxu0 0
        %1025 = vmatpush1.bf16.msra.mxu0 0
        %1026 = vmatprep.subr.bf16.mxu0 0
        %1027 = vmatpush1.bf16.msra.mxu0 0
        %1028 = vmatprep.subr.bf16.mxu0 0
        %1029 = vmatpush1.bf16.msra.mxu0 0
        %1030 = vmatprep.subr.bf16.mxu0 0
        %1031 = vmatpush1.bf16.msra.mxu0 0
        %1032 = vmatprep.subr.bf16.mxu0 0
        %1033 = vmatpush1.bf16.msra.mxu0 0
        %1034 = vmatprep.mubr.bf16.mxu0 0
        %1035 = vmatmul.mubr.bf16.gmra.mrb[0].mxu0 %v997
        %v1036 = vpop.f32.mrb[0].mxu0
        %v1037 = vadd.f32 0.0, %v1036
        %v1038 = vpop.f32.mrb[0].mxu0
        %v1039 = vpop.f32.mrb[0].mxu0
        %v1040 = vpop.f32.mrb[0].mxu0
        %1041 = vdwg.mxu0
        %1043 = vrot.lane.b32.xlu0 %v1037, 24
        %v1044 = vpop.permute.xlu0 %1043
        %vm1046 = vcmask 261312
        %1047 = vst.msk [vmem:[#allocation3] sm:$0xff] %vm1046, %v1044
        %v1048 = vld [vmem:[#allocation3] sm:$0xff]
        %v1049 = vpack.c.bf16 %v1048, %v1048
        %v1050 = vld [vmem:[%s478] sm:$0xf]
        %v1051 = vld [vmem:[%s478 + $0x4] sm:$0xf]
        %v1052 = vld [vmem:[%s478 + $0x8] sm:$0xf]
        %v1053 = vld [vmem:[%s478 + $0xc] sm:$0xf]
        %v1054 = vlaneseq
        %v1055 = vshrl.u32 %v1054, 7
        %v1056 = vsub.s32 4, %v1055
        %v1057 = vrot.slane %v509, %v1056
        %v1062 = vunpack.c.l.b16 %v1050
        %v1063 = vunpack.c.l.b16 %v1051
        %v1064 = vunpack.c.l.b16 %v1052
        %v1065 = vunpack.c.l.b16 %v1053
        %v1066 = vpack.c.b16 %v1063, %v1062
        %v1067 = vpack.c.b16 %v1065, %v1064
        %v1071 = vsel %vm534, %v1049, 0
        %1073 = vmatprep.subr.bf16.mxu0 0
        %1074 = vmatpush1.bf16.msra.mxu0 %v1066
        %1075 = vmatprep.subr.bf16.mxu0 0
        %1076 = vmatpush1.bf16.msra.mxu0 %v1067
        %1077 = vmatprep.subr.bf16.mxu0 0
        %1078 = vmatpush1.bf16.msra.mxu0 0
        %1079 = vmatprep.subr.bf16.mxu0 0
        %1080 = vmatpush1.bf16.msra.mxu0 0
        %1081 = vmatprep.subr.bf16.mxu0 0
        %1082 = vmatpush1.bf16.msra.mxu0 0
        %1083 = vmatprep.subr.bf16.mxu0 0
        %1084 = vmatpush1.bf16.msra.mxu0 0
        %1085 = vmatprep.subr.bf16.mxu0 0
        %1086 = vmatpush1.bf16.msra.mxu0 0
        %1087 = vmatprep.subr.bf16.mxu0 0
        %1088 = vmatpush1.bf16.msra.mxu0 0
        %1089 = vmatprep.subr.bf16.mxu0 0
        %1090 = vmatpush1.bf16.msra.mxu0 0
        %1091 = vmatprep.subr.bf16.mxu0 0
        %1092 = vmatpush1.bf16.msra.mxu0 0
        %1093 = vmatprep.subr.bf16.mxu0 0
        %1094 = vmatpush1.bf16.msra.mxu0 0
        %1095 = vmatprep.subr.bf16.mxu0 0
        %1096 = vmatpush1.bf16.msra.mxu0 0
        %1097 = vmatprep.subr.bf16.mxu0 0
        %1098 = vmatpush1.bf16.msra.mxu0 0
        %1099 = vmatprep.subr.bf16.mxu0 0
        %1100 = vmatpush1.bf16.msra.mxu0 0
        %1101 = vmatprep.subr.bf16.mxu0 0
        %1102 = vmatpush1.bf16.msra.mxu0 0
        %1103 = vmatprep.subr.bf16.mxu0 0
        %1104 = vmatpush1.bf16.msra.mxu0 0
        %1105 = vmatprep.mubr.bf16.mxu0 0
        %1106 = vmatmul.mubr.bf16.gmra.mrb[0].mxu0 %v1071
        %v1107 = vpop.f32.mrb[0].mxu0
        %v1108 = vadd.f32 %v1057, %v1107
        %v1109 = vpop.f32.mrb[0].mxu0
        %v1110 = vpop.f32.mrb[0].mxu0
        %v1111 = vpop.f32.mrb[0].mxu0
        %1112 = vdwg.mxu0
        %v1113 = vadd.f32 %v507, %v1108
        %v1114 = vsel %vm534, %v1113, 0.0
        %1115 = vadd.xlane.f32.xlu0 %v1114
        %v1116 = vpop.xlane.xlu0 %1115
        %v1117 = vrcp.pop 32.0
        %v1118 = vmul.f32 %v1116, %v1117
        %v1119 = vsub.f32 %v1113, %v1118
        %v1120 = vmul.f32 %v1119, %v1119
        %v1121 = vsel %vm534, %v1120, 0.0
        %1122 = vadd.xlane.f32.xlu0 %v1121
        %v1123 = vpop.xlane.xlu0 %1122
        %v1124 = vmul.f32 %v1123, %v1117
        %v1125 = vadd.f32 %v1124, 1e-05
        %v1126 = vrsqrt.pop %v1125
        %v1127 = vmul.f32 %v1119, %v1126
        %v1128 = vlaneseq
        %v1129 = vshrl.u32 %v1128, 7
        %v1130 = vsub.s32 0, %v1129
        %v1131 = vrot.slane %v509, %v1130
        %v1132 = vmul.f32 %v1127, %v1131
        %v1133 = vlaneseq
        %v1134 = vshrl.u32 %v1133, 7
        %v1135 = vsub.s32 1, %v1134
        %v1136 = vrot.slane %v509, %v1135
        %v1137 = vadd.f32 %v1132, %v1136
        %v1138 = vpack.c.bf16 %v1137, %v1137
        %v1139 = vld [vmem:[%s483] sm:$0xf]
        %v1140 = vld [vmem:[%s483 + $0x4] sm:$0xf]
        %v1141 = vld [vmem:[%s483 + $0x8] sm:$0xf]
        %v1142 = vld [vmem:[%s483 + $0xc] sm:$0xf]
        %v1143 = vld [vmem:[%s494] sm:$0x1]
        %v1145 = vlaneseq
        %v1146 = vshrl.u32 %v1145, 7
        %v1147 = vsub.s32 0, %v1146
        %v1148 = vrot.slane %v1143, %v1147
        %v1154 = vunpack.c.l.b16 %v1139
        %v1155 = vunpack.c.l.b16 %v1140
        %v1156 = vunpack.c.l.b16 %v1141
        %v1157 = vunpack.c.l.b16 %v1142
        %v1158 = vpack.c.b16 %v1155, %v1154
        %v1159 = vpack.c.b16 %v1157, %v1156
        %v1163 = vsel %vm534, %v1138, 0
        %1165 = vmatprep.subr.bf16.mxu0 0
        %1166 = vmatpush1.bf16.msra.mxu0 %v1158
        %1167 = vmatprep.subr.bf16.mxu0 0
        %1168 = vmatpush1.bf16.msra.mxu0 %v1159
        %1169 = vmatprep.subr.bf16.mxu0 0
        %1170 = vmatpush1.bf16.msra.mxu0 0
        %1171 = vmatprep.subr.bf16.mxu0 0
        %1172 = vmatpush1.bf16.msra.mxu0 0
        %1173 = vmatprep.subr.bf16.mxu0 0
        %1174 = vmatpush1.bf16.msra.mxu0 0
        %1175 = vmatprep.subr.bf16.mxu0 0
        %1176 = vmatpush1.bf16.msra.mxu0 0
        %1177 = vmatprep.subr.bf16.mxu0 0
        %1178 = vmatpush1.bf16.msra.mxu0 0
        %1179 = vmatprep.subr.bf16.mxu0 0
        %1180 = vmatpush1.bf16.msra.mxu0 0
        %1181 = vmatprep.subr.bf16.mxu0 0
        %1182 = vmatpush1.bf16.msra.mxu0 0
        %1183 = vmatprep.subr.bf16.mxu0 0
        %1184 = vmatpush1.bf16.msra.mxu0 0
        %1185 = vmatprep.subr.bf16.mxu0 0
        %1186 = vmatpush1.bf16.msra.mxu0 0
        %1187 = vmatprep.subr.bf16.mxu0 0
        %1188 = vmatpush1.bf16.msra.mxu0 0
        %1189 = vmatprep.subr.bf16.mxu0 0
        %1190 = vmatpush1.bf16.msra.mxu0 0
        %1191 = vmatprep.subr.bf16.mxu0 0
        %1192 = vmatpush1.bf16.msra.mxu0 0
        %1193 = vmatprep.subr.bf16.mxu0 0
        %1194 = vmatpush1.bf16.msra.mxu0 0
        %1195 = vmatprep.subr.bf16.mxu0 0
        %1196 = vmatpush1.bf16.msra.mxu0 0
        %1197 = vmatprep.mubr.bf16.mxu0 0
        %1198 = vmatmul.mubr.bf16.gmra.mrb[0].mxu0 %v1163
        %v1199 = vpop.f32.mrb[0].mxu0
        %v1200 = vadd.f32 %v1148, %v1199
        %v1201 = vpop.f32.mrb[0].mxu0
        %v1202 = vpop.f32.mrb[0].mxu0
        %v1203 = vpop.f32.mrb[0].mxu0
        %1204 = vdwg.mxu0
        %v1205 = vmax.f32 %v1200, 0.0
        %v1206 = vpack.c.bf16 %v1205, %v1205
        %v1207 = vld [vmem:[%s488] sm:$0xf]
        %v1208 = vld [vmem:[%s488 + $0x4] sm:$0xf]
        %v1209 = vld [vmem:[%s488 + $0x8] sm:$0xf]
        %v1210 = vld [vmem:[%s488 + $0xc] sm:$0xf]
        %v1211 = vld [vmem:[%s488 + $0x10] sm:$0xf]
        %v1212 = vld [vmem:[%s488 + $0x14] sm:$0xf]
        %v1213 = vld [vmem:[%s488 + $0x18] sm:$0xf]
        %v1214 = vld [vmem:[%s488 + $0x1c] sm:$0xf]
        %v1215 = vlaneseq
        %v1216 = vshrl.u32 %v1215, 7
        %v1217 = vsub.s32 5, %v1216
        %v1218 = vrot.slane %v509, %v1217
        %v1227 = vunpack.c.l.b16 %v1207
        %v1228 = vunpack.c.l.b16 %v1208
        %v1229 = vunpack.c.l.b16 %v1209
        %v1230 = vunpack.c.l.b16 %v1210
        %v1231 = vunpack.c.l.b16 %v1211
        %v1232 = vunpack.c.l.b16 %v1212
        %v1233 = vunpack.c.l.b16 %v1213
        %v1234 = vunpack.c.l.b16 %v1214
        %v1235 = vpack.c.b16 %v1228, %v1227
        %v1236 = vpack.c.b16 %v1230, %v1229
        %v1237 = vpack.c.b16 %v1232, %v1231
        %v1238 = vpack.c.b16 %v1234, %v1233
        %vm1243 = vcmask 523264
        %v1245 = vsel %vm1243, %v1206, 0
        %1247 = vmatprep.subr.bf16.mxu0 0
        %1248 = vmatpush1.bf16.msra.mxu0 %v1235
        %1249 = vmatprep.subr.bf16.mxu0 0
        %1250 = vmatpush1.bf16.msra.mxu0 %v1236
        %1251 = vmatprep.subr.bf16.mxu0 0
        %1252 = vmatpush1.bf16.msra.mxu0 %v1237
        %1253 = vmatprep.subr.bf16.mxu0 0
        %1254 = vmatpush1.bf16.msra.mxu0 %v1238
        %1255 = vmatprep.subr.bf16.mxu0 0
        %1256 = vmatpush1.bf16.msra.mxu0 0
        %1257 = vmatprep.subr.bf16.mxu0 0
        %1258 = vmatpush1.bf16.msra.mxu0 0
        %1259 = vmatprep.subr.bf16.mxu0 0
        %1260 = vmatpush1.bf16.msra.mxu0 0
        %1261 = vmatprep.subr.bf16.mxu0 0
        %1262 = vmatpush1.bf16.msra.mxu0 0
        %1263 = vmatprep.subr.bf16.mxu0 0
        %1264 = vmatpush1.bf16.msra.mxu0 0
        %1265 = vmatprep.subr.bf16.mxu0 0
        %1266 = vmatpush1.bf16.msra.mxu0 0
        %1267 = vmatprep.subr.bf16.mxu0 0
        %1268 = vmatpush1.bf16.msra.mxu0 0
        %1269 = vmatprep.subr.bf16.mxu0 0
        %1270 = vmatpush1.bf16.msra.mxu0 0
        %1271 = vmatprep.subr.bf16.mxu0 0
        %1272 = vmatpush1.bf16.msra.mxu0 0
        %1273 = vmatprep.subr.bf16.mxu0 0
        %1274 = vmatpush1.bf16.msra.mxu0 0
        %1275 = vmatprep.subr.bf16.mxu0 0
        %1276 = vmatpush1.bf16.msra.mxu0 0
        %1277 = vmatprep.subr.bf16.mxu0 0
        %1278 = vmatpush1.bf16.msra.mxu0 0
        %1279 = vmatprep.mubr.bf16.mxu0 0
        %1280 = vmatmul.mubr.bf16.gmra.mrb[0].mxu0 %v1245
        %v1281 = vpop.f32.mrb[0].mxu0
        %v1282 = vadd.f32 %v1218, %v1281
        %v1283 = vpop.f32.mrb[0].mxu0
        %v1284 = vpop.f32.mrb[0].mxu0
        %v1285 = vpop.f32.mrb[0].mxu0
        %1286 = vdwg.mxu0
        %v1287 = vadd.f32 %v1137, %v1282
        %v1288 = vsel %vm534, %v1287, 0.0
        %1289 = vadd.xlane.f32.xlu0 %v1288
        %v1290 = vpop.xlane.xlu0 %1289
        %v1291 = vmul.f32 %v1290, %v1117
        %v1292 = vsub.f32 %v1287, %v1291
        %v1293 = vmul.f32 %v1292, %v1292
        %v1294 = vsel %vm534, %v1293, 0.0
        %1295 = vadd.xlane.f32.xlu0 %v1294
        %v1296 = vpop.xlane.xlu0 %1295
        %v1297 = vmul.f32 %v1296, %v1117
        %v1298 = vadd.f32 %v1297, 1e-05
        %v1299 = vrsqrt.pop %v1298
        %v1300 = vmul.f32 %v1292, %v1299
        %v1301 = vlaneseq
        %v1302 = vshrl.u32 %v1301, 7
        %v1303 = vsub.s32 2, %v1302
        %v1304 = vrot.slane %v509, %v1303
        %v1305 = vmul.f32 %v1300, %v1304
        %v1306 = vlaneseq
        %v1307 = vshrl.u32 %v1306, 7
        %v1308 = vsub.s32 3, %v1307
        %v1309 = vrot.slane %v509, %v1308
        %v1310 = vadd.f32 %v1305, %v1309
        %1311 = vst.msk [vmem:[#allocation2] sm:$0xff] %vm534, %v1310
        %p1312 = scmp.eq.s32.totalorder %s31, 1
        // Predicated region
        $region65: #{tpu_custom_call.1} parent=55 // pred_check
          %p1313 = pneg %p1312
        $region66: #{tpu_custom_call.1} parent=55 // pred_check_branch
          %1315 = sbr.rel (%p1313) target = $region68
        $region67: #{tpu_custom_call.1} parent=55 // pred_region
          %v1316 = vsel %vm534, %v1310, 0.0
          %1317 = vadd.xlane.f32.xlu0 %v1316
          %v1318 = vpop.xlane.xlu0 %1317
          %v1319 = vmul.f32 %v1318, %v1117
          %v1320 = vsub.f32 %v1310, %v1319
          %v1321 = vmul.f32 %v1320, %v1320
          %v1322 = vsel %vm534, %v1321, 0.0
          %1323 = vadd.xlane.f32.xlu0 %v1322
          %v1324 = vpop.xlane.xlu0 %1323
          %v1325 = vmul.f32 %v1324, %v1117
          %v1326 = vadd.f32 %v1325, 1e-06
          %v1327 = vrsqrt.pop %v1326
          %v1328 = vmul.f32 %v1320, %v1327
          %v1329 = vlaneseq
          %v1330 = vshrl.u32 %v1329, 7
          %v1331 = vsub.s32 6, %v1330
          %v1332 = vrot.slane %v509, %v1331
          %v1333 = vmul.f32 %v1328, %v1332
          %v1334 = vlaneseq
          %v1335 = vshrl.u32 %v1334, 7
          %v1336 = vsub.s32 7, %v1335
          %v1337 = vrot.slane %v509, %v1336
          %v1338 = vadd.f32 %v1333, %v1337
          %1339 = vst.msk [vmem:[%s465] sm:$0xff] %vm534, %v1338
        $region68: #{tpu_custom_call.1} parent=55 // pred_fallthru
          _
        %s1340 = sand.u32 %s280, 1
        %s1341 = scalar_lea.sflag [#allocation6], %s1340
        %s1342 = sand.u32 %s280, 1
        %s1343 = smul.addr %s1342, 8
        %s1344 = scalar_lea.vmem [#allocation7], %s1343
        // Predicated region
        $region69: #{tpu_custom_call.1} parent=55 // pred_check
          %p1345 = pneg %p290
        $region70: #{tpu_custom_call.1} parent=55 // pred_check_branch
          %1347 = sbr.rel (%p1345) target = $region72
        $region71: #{tpu_custom_call.1} parent=55 // pred_region
          %s1349 = ssub.s32 128, 128
          %1350 = vsyncadd %s1341, %s1349
          %s1351 = smul.addr %s30, 128
          %s1352 = scalar_lea.hbm %s9, %s1351
          %s1354 = sshll.u32 %s1344, 4
          %s1355 = int_to_ptr.vmem [resolvable:$true] %s1354
          %1357 = dma.vmem_to_hbm [thread:$0]  %s1355, 128, %s1352, %s1341
        $region72: #{tpu_custom_call.1} parent=55 // pred_fallthru
          _
      $region56: #{tpu_custom_call.1} parent=5 // pred_fallthru
        _
      %p1358 = scmp.le.s32.totalorder 2, %s21
      // Predicated region
      $region73: #{tpu_custom_call.1} parent=5 // pred_check
        %p1359 = pneg %p1358
      $region74: #{tpu_custom_call.1} parent=5 // pred_check_branch
        %1361 = sbr.rel (%p1359) target = $region76
      $region75: #{tpu_custom_call.1} parent=5 // pred_region
        %s1362 = ssub.s32 %s21, 2
        // Predicated region
        $region77: #{tpu_custom_call.1} parent=75 // pred_check
          %p1363 = pneg %p296
        $region78: #{tpu_custom_call.1} parent=75 // pred_check_branch
          %1365 = sbr.rel (%p1363) target = $region80
        $region79: #{tpu_custom_call.1} parent=75 // pred_region
          %s1366 = sand.u32 %s281, 1
          %s1367 = scalar_lea.sflag [#allocation6], %s1366
          %s1368 = sand.u32 %s281, 1
          %s1369 = smul.addr %s1368, 8
          %s1370 = scalar_lea.vmem [#allocation7], %s1369
          %1371 = dma.done %s1367, 128
        $region80: #{tpu_custom_call.1} parent=75 // pred_fallthru
          _
      $region76: #{tpu_custom_call.1} parent=5 // pred_fallthru
        _
    $region6: #{tpu_custom_call.1} parent=1 // loop_footer
      %s25 = sadd.s32 1, %s21
    $region7: #{tpu_custom_call.1} parent=1 // loop_footer_branch
      %20 = sbr.rel target = $region3
    $region8: #{tpu_custom_call.1} parent=1 // loop_exit
      _
    %1372 = vsyncpa [#allocation5], 1
    %s1373 = scalar_lea.sflag [#allocation5], 1
    %1374 = vsyncpa %s1373, 1
    %1375 = vsyncpa [#allocation6], 1
    %s1376 = scalar_lea.sflag [#allocation6], 1
    %1377 = vsyncpa %s1376, 1

</llo_original>
